<compile_context>
chip_gen: v6e
topology: v6e:2x2x1
jax: 0.10.0
libtpu: 0.0.40
codegen_flags: <defaults>
</compile_context>

<pallas_src>
import functools

import jax
import jax.numpy as jnp
from jax.experimental import pallas as pl
from jax.experimental.pallas import tpu as pltpu


def _round_up(v: int, m: int) -> int:
    return (v + m - 1) // m * m


def _vmem_limit_bytes() -> int:
    """Per-generation scoped VMEM limit: ~3/4 of physical, capped at 100 MiB."""
    try:
        cap = pltpu.get_tpu_info().vmem_capacity_bytes
    except Exception:
        cap = 64 * 1024 * 1024  # conservative (v7x-sized) default
    return int(min(cap * 3 // 4, 100 * 1024 * 1024))


def _mlp_fused_kernel(*refs, num_layers: int):
    # refs = (x_ref, w0, b0, w1, b1, ..., w{L-1}, b{L-1}, o_ref)
    x_ref = refs[0]
    o_ref = refs[1 + 2 * num_layers]
    compute_dtype = x_ref.dtype

    # Layer 0: native-dtype operands straight to the MXU, f32 accumulation.
    act_f32 = jnp.dot(x_ref[...], refs[1][...],
                      preferred_element_type=jnp.float32)
    act_f32 = act_f32 + refs[2][...].astype(jnp.float32)

    for i in range(1, num_layers):
        w_ref = refs[1 + 2 * i]
        b_ref = refs[2 + 2 * i]
        # ReLU on the f32 accumulator, then downcast to the compute dtype so
        # the next matmul stays on the fast (bf16) MXU path.
        act = jnp.maximum(act_f32, 0.0).astype(compute_dtype)
        act_f32 = jnp.dot(act, w_ref[...], preferred_element_type=jnp.float32)
        act_f32 = act_f32 + b_ref[...].astype(jnp.float32)

    o_ref[...] = act_f32.astype(o_ref.dtype)


def prepare_mlp_params(params, compute_dtype=None):
    """One-time pad (+optional cast) of the MLP weights for the fused kernel.

    params: list of (w, b) with w: (in, out) [transposed vs. PyTorch
    nn.Linear.weight], b: (out,) or (1, out).

    Hoisting the zero-padding here removes a full HBM read+write of the weight
    set from every forward call.
    """
    dims = [params[0][0].shape[0]] + [w.shape[1] for (w, _) in params]
    dims_pad = [_round_up(d, 128) for d in dims]
    cdt = jnp.dtype(compute_dtype) if compute_dtype is not None \
        else jnp.dtype(params[0][0].dtype)

    ws, bs = [], []
    for li, (w, b) in enumerate(params):
        kp, np_ = dims_pad[li], dims_pad[li + 1]
        w = jnp.asarray(w, cdt)
        b = jnp.asarray(b, cdt).reshape(1, -1)
        ws.append(jnp.zeros((kp, np_), cdt).at[:w.shape[0], :w.shape[1]].set(w))
        bs.append(jnp.zeros((1, np_), cdt).at[:, :b.shape[1]].set(b))

    return {"weights": ws, "biases": bs, "dims": dims, "dims_pad": dims_pad,
            "compute_dtype": cdt}


def mlp_forward(prepared, x, *, tile_m: int = 512):
    """Fused MLP forward. x: (..., input_dim) -> (..., output_dim)."""
    ws, bs = prepared["weights"], prepared["biases"]
    dims, dims_pad = prepared["dims"], prepared["dims_pad"]
    cdt = prepared["compute_dtype"]
    num_layers = len(ws)
    out_dim = dims[-1]
    out_dtype = x.dtype

    lead_shape = x.shape[:-1]
    in_dim = x.shape[-1]
    assert in_dim == dims[0], (in_dim, dims[0])
    xf = x.reshape(-1, in_dim).astype(cdt)
    M = xf.shape[0]

    # ---- Row tiling ------------------------------------------------------
    # Use a big tile (amortizes per-step overhead / weight pushes), but for
    # small M shrink it so the grid has >= 2 steps -> both v7x TCs get work.
    m8 = _round_up(max(M, 1), 8)
    tile_m_eff = min(tile_m, _round_up(pl.cdiv(m8, 2), 8)) if m8 >= 16 else m8
    tile_m_eff = max(tile_m_eff, 8)

    vmem_limit = _vmem_limit_bytes()
    itemsize = jnp.dtype(cdt).itemsize
    out_itemsize = jnp.dtype(out_dtype).itemsize
    w_bytes = sum(int(w.size) * w.dtype.itemsize for w in ws)  # 1 copy (Buffered(1))
    b_bytes = sum(int(b.size) * b.dtype.itemsize for b in bs)
    max_dim = max(dims_pad)

    def _act_bytes(t):
        # double-buffered x / out blocks + f32 accumulator + compute-dtype copy
        return (2 * t * dims_pad[0] * itemsize
                + 2 * t * dims_pad[-1] * out_itemsize
                + t * max_dim * (4 + itemsize))

    # Shrink the row tile until the fused working set fits the VMEM budget.
    while tile_m_eff > 8 and w_bytes + b_bytes + _act_bytes(tile_m_eff) > vmem_limit:
        tile_m_eff = max(8, _round_up(tile_m_eff // 2, 8))

    if w_bytes + b_bytes + _act_bytes(tile_m_eff) > vmem_limit:
        # Weights alone do not fit VMEM -> the all-layers-resident fusion would
        # thrash / OOM. Fall back to plain XLA matmuls (still bf16 MXU path).
        # TODO(synk): tile the hidden dimension (second grid axis /
        # emit_pipeline) instead of this fallback for very large hidden sizes.
        act = xf
        for i in range(num_layers):
            act = jnp.dot(act, ws[i][:dims[i], :dims[i + 1]],
                          preferred_element_type=jnp.float32)
            act = act + bs[i][:, :dims[i + 1]].astype(jnp.float32)
            if i < num_layers - 1:
                act = jnp.maximum(act, 0.0).astype(cdt)
        return act.astype(out_dtype).reshape(*lead_shape, out_dim)

    m_pad = _round_up(m8, tile_m_eff)
    grid = (m_pad // tile_m_eff,)

    # Per-call padding of x only (zero lanes / rows contribute 0 to matmuls).
    x_pad = jnp.zeros((m_pad, dims_pad[0]), cdt).at[:M, :in_dim].set(xf)

    flops = 2 * m_pad * sum(dims_pad[i] * dims_pad[i + 1]
                            for i in range(num_layers))
    bytes_accessed = (x_pad.size * itemsize + w_bytes + b_bytes
                      + m_pad * dims_pad[-1] * out_itemsize)

    kernel = functools.partial(_mlp_fused_kernel, num_layers=num_layers)

    def _call_kernel(single_buffer_weights: bool):
        in_specs = [pl.BlockSpec((tile_m_eff, dims_pad[0]), lambda i: (i, 0))]
        flat_inputs = [x_pad]
        for li in range(num_layers):
            kp, np_ = dims_pad[li], dims_pad[li + 1]
            if single_buffer_weights:
                # Constant index_map -> one resident copy is enough; double
                # buffering weights only burns VMEM (biggest issue on v7x).
                w_spec = pl.BlockSpec((kp, np_), lambda i: (0, 0),
                                      pipeline_mode=pl.Buffered(buffer_count=1))
                b_spec = pl.BlockSpec((1, np_), lambda i: (0, 0),
                                      pipeline_mode=pl.Buffered(buffer_count=1))
            else:
                w_spec = pl.BlockSpec((kp, np_), lambda i: (0, 0))
                b_spec = pl.BlockSpec((1, np_), lambda i: (0, 0))
            in_specs += [w_spec, b_spec]
            flat_inputs += [ws[li], bs[li]]

        return pl.pallas_call(
            kernel,
            out_shape=jax.ShapeDtypeStruct((m_pad, dims_pad[-1]), out_dtype),
            grid=grid,
            in_specs=in_specs,
            out_specs=pl.BlockSpec((tile_m_eff, dims_pad[-1]), lambda i: (i, 0)),
            compiler_params=pltpu.CompilerParams(
                dimension_semantics=("parallel",),   # shard M across TCs (v7x)
                vmem_limit_bytes=vmem_limit,
            ),
            cost_estimate=pl.CostEstimate(
                flops=flops, transcendentals=0, bytes_accessed=bytes_accessed),
        )(*flat_inputs)

    try:
        out_pad = _call_kernel(True)
    except Exception:
        # Older jax versions may reject Buffered(buffer_count=1); fall back to
        # default (double-buffered) weight specs — correctness is identical.
        out_pad = _call_kernel(False)

    out = out_pad[:M, :out_dim]
    return out.reshape(*lead_shape, out_dim)


def init_mlp_params(key, input_dim, hidden_dim, output_dim, num_layers,
                    dtype=jnp.float32):
    """Deterministic init mimicking nn.Linear default (uniform +-1/sqrt(fan_in)).

    Returns list of (w, b) with w: (in, out) [transposed vs. PyTorch], b: (1, out).
    """
    h = [hidden_dim] * (num_layers - 1)
    dims_in = [input_dim] + h
    dims_out = h + [output_dim]
    params = []
    for n, k in zip(dims_in, dims_out):
        key, kw, kb = jax.random.split(key, 3)
        bound = 1.0 / (n ** 0.5)
        w = jax.random.uniform(kw, (n, k), dtype=dtype, minval=-bound, maxval=bound)
        b = jax.random.uniform(kb, (1, k), dtype=dtype, minval=-bound, maxval=bound)
        params.append((w, b))
    return params


if __name__ == "__main__":
    # Shapes consistent with ConditionalDETR's refine-decoder bbox MLP
    # (hidden -> hidden -> 4, applied over (num_queries, batch, dim)).
    input_dim, hidden_dim, output_dim, num_layers = 32, 32, 4, 3
    num_queries, batch = 8, 2

    key = jax.random.PRNGKey(0)
    key, kx = jax.random.split(key)
    x = jax.random.normal(kx, (num_queries, batch, input_dim), dtype=jnp.float32)

    params = init_mlp_params(key, input_dim, hidden_dim, output_dim, num_layers)

    # One-time prepare: pad weights to 128-lane multiples and cast to bf16
    # (native MXU operand dtype — the main perf lever from the review).
    prepared = prepare_mlp_params(params, compute_dtype=jnp.bfloat16)

    out = mlp_forward(prepared, x)
    jax.block_until_ready(out)

    # Pure-JAX reference with identical dtype handling (bf16 operands,
    # f32 accumulation, bf16 intermediate activations) so the comparison
    # isolates kernel/padding correctness from bf16 rounding.
    act = x.reshape(-1, input_dim).astype(jnp.bfloat16)
    for i, (w, b) in enumerate(params):
        act = jnp.dot(act, w.astype(jnp.bfloat16),
                      preferred_element_type=jnp.float32)
        act = act + b.reshape(1, -1).astype(jnp.bfloat16).astype(jnp.float32)
        if i < num_layers - 1:
            act = jnp.maximum(act, 0.0).astype(jnp.bfloat16)
    ref = act.astype(x.dtype).reshape(num_queries, batch, output_dim)

    assert out.shape == (num_queries, batch, output_dim)
    assert jnp.allclose(out, ref, atol=1e-3, rtol=1e-3), \
        float(jnp.max(jnp.abs(out - ref)))

    print("KERNEL_OK")
</pallas_src>

<mosaic_0001>
module attributes {stable_mosaic.version = 11 : i64} {
  func.func @_mlp_fused_kernel(%arg0: i32, %arg1: memref<8x128xbf16, #tpu.memory_space<vmem>>, %arg2: memref<128x128xbf16, #tpu.memory_space<vmem>>, %arg3: memref<1x128xbf16, #tpu.memory_space<vmem>>, %arg4: memref<128x128xbf16, #tpu.memory_space<vmem>>, %arg5: memref<1x128xbf16, #tpu.memory_space<vmem>>, %arg6: memref<128x128xbf16, #tpu.memory_space<vmem>>, %arg7: memref<1x128xbf16, #tpu.memory_space<vmem>>, %arg8: memref<8x128xf32, #tpu.memory_space<vmem>>) attributes {dimension_semantics = [#tpu.dimension_semantics<parallel>], iteration_bounds = array<i64: 2>, scalar_prefetch = 0 : i64, scratch_operands = 0 : i64, tpu.core_type = #tpu.core_type<tc>, window_params = [{transform_indices = @transform_0, window_bounds = array<i64: 8, 128>}, {pipeline_mode = #tpu.pipeline_mode<synchronous>, transform_indices = @transform_1, window_bounds = array<i64: 128, 128>}, {pipeline_mode = #tpu.pipeline_mode<synchronous>, transform_indices = @transform_2, window_bounds = array<i64: 1, 128>}, {pipeline_mode = #tpu.pipeline_mode<synchronous>, transform_indices = @transform_3, window_bounds = array<i64: 128, 128>}, {pipeline_mode = #tpu.pipeline_mode<synchronous>, transform_indices = @transform_4, window_bounds = array<i64: 1, 128>}, {pipeline_mode = #tpu.pipeline_mode<synchronous>, transform_indices = @transform_5, window_bounds = array<i64: 128, 128>}, {pipeline_mode = #tpu.pipeline_mode<synchronous>, transform_indices = @transform_6, window_bounds = array<i64: 1, 128>}, {transform_indices = @transform_7, window_bounds = array<i64: 8, 128>}]} {
    %c0 = arith.constant 0 : index
    %c0_0 = arith.constant 0 : index
    %0 = vector.load %arg1[%c0, %c0_0] : memref<8x128xbf16, #tpu.memory_space<vmem>>, vector<8x128xbf16>
    %c0_1 = arith.constant 0 : index
    %c0_2 = arith.constant 0 : index
    %1 = vector.load %arg2[%c0_1, %c0_2] : memref<128x128xbf16, #tpu.memory_space<vmem>>, vector<128x128xbf16>
    %cst = arith.constant dense<0.000000e+00> : vector<8x128xf32>
    %2 = tpu.matmul %0, %1, %cst {dimension_numbers = #tpu.dot_dimension_numbers<[1], [0], [0], [1], [0, 0, 1, 1], [], []>} : vector<8x128xbf16>, vector<128x128xbf16>, vector<8x128xf32> -> vector<8x128xf32>
    %c0_3 = arith.constant 0 : index
    %c0_4 = arith.constant 0 : index
    %3 = vector.load %arg3[%c0_3, %c0_4] : memref<1x128xbf16, #tpu.memory_space<vmem>>, vector<1x128xbf16>
    %4 = arith.extf %3 : vector<1x128xbf16> to vector<1x128xf32>
    %5 = vector.broadcast %4 : vector<1x128xf32> to vector<8x128xf32>
    %6 = arith.addf %2, %5 : vector<8x128xf32>
    %cst_5 = arith.constant 0.000000e+00 : f32
    %7 = vector.broadcast %cst_5 : f32 to vector<8x128xf32>
    %8 = arith.maximumf %6, %7 : vector<8x128xf32>
    %9 = arith.truncf %8 : vector<8x128xf32> to vector<8x128xbf16>
    %c0_6 = arith.constant 0 : index
    %c0_7 = arith.constant 0 : index
    %10 = vector.load %arg4[%c0_6, %c0_7] : memref<128x128xbf16, #tpu.memory_space<vmem>>, vector<128x128xbf16>
    %cst_8 = arith.constant dense<0.000000e+00> : vector<8x128xf32>
    %11 = tpu.matmul %9, %10, %cst_8 {dimension_numbers = #tpu.dot_dimension_numbers<[1], [0], [0], [1], [0, 0, 1, 1], [], []>} : vector<8x128xbf16>, vector<128x128xbf16>, vector<8x128xf32> -> vector<8x128xf32>
    %c0_9 = arith.constant 0 : index
    %c0_10 = arith.constant 0 : index
    %12 = vector.load %arg5[%c0_9, %c0_10] : memref<1x128xbf16, #tpu.memory_space<vmem>>, vector<1x128xbf16>
    %13 = arith.extf %12 : vector<1x128xbf16> to vector<1x128xf32>
    %14 = vector.broadcast %13 : vector<1x128xf32> to vector<8x128xf32>
    %15 = arith.addf %11, %14 : vector<8x128xf32>
    %cst_11 = arith.constant 0.000000e+00 : f32
    %16 = vector.broadcast %cst_11 : f32 to vector<8x128xf32>
    %17 = arith.maximumf %15, %16 : vector<8x128xf32>
    %18 = arith.truncf %17 : vector<8x128xf32> to vector<8x128xbf16>
    %c0_12 = arith.constant 0 : index
    %c0_13 = arith.constant 0 : index
    %19 = vector.load %arg6[%c0_12, %c0_13] : memref<128x128xbf16, #tpu.memory_space<vmem>>, vector<128x128xbf16>
    %cst_14 = arith.constant dense<0.000000e+00> : vector<8x128xf32>
    %20 = tpu.matmul %18, %19, %cst_14 {dimension_numbers = #tpu.dot_dimension_numbers<[1], [0], [0], [1], [0, 0, 1, 1], [], []>} : vector<8x128xbf16>, vector<128x128xbf16>, vector<8x128xf32> -> vector<8x128xf32>
    %c0_15 = arith.constant 0 : index
    %c0_16 = arith.constant 0 : index
    %21 = vector.load %arg7[%c0_15, %c0_16] : memref<1x128xbf16, #tpu.memory_space<vmem>>, vector<1x128xbf16>
    %22 = arith.extf %21 : vector<1x128xbf16> to vector<1x128xf32>
    %23 = vector.broadcast %22 : vector<1x128xf32> to vector<8x128xf32>
    %24 = arith.addf %20, %23 : vector<8x128xf32>
    %c0_17 = arith.constant 0 : index
    %c0_18 = arith.constant 0 : index
    %25 = vector.load %arg8[%c0_17, %c0_18] : memref<8x128xf32, #tpu.memory_space<vmem>>, vector<8x128xf32>
    tpu.vector_store %arg8[%c0_17, %c0_18], %24 {strides = array<i32>} : memref<8x128xf32, #tpu.memory_space<vmem>>, vector<8x128xf32>,
    return
  }
  func.func @transform_0(%arg0: i32) -> (i32, i32) {
    %c0_i32 = arith.constant 0 : i32
    %c0_i32_0 = arith.constant 0 : i32
    return %arg0, %c0_i32 : i32, i32
  }
  func.func @transform_1(%arg0: i32) -> (i32, i32) {
    %c0_i32 = arith.constant 0 : i32
    %c0_i32_0 = arith.constant 0 : i32
    %c0_i32_1 = arith.constant 0 : i32
    return %c0_i32, %c0_i32_0 : i32, i32
  }
  func.func @transform_2(%arg0: i32) -> (i32, i32) {
    %c0_i32 = arith.constant 0 : i32
    %c0_i32_0 = arith.constant 0 : i32
    %c0_i32_1 = arith.constant 0 : i32
    return %c0_i32, %c0_i32_0 : i32, i32
  }
  func.func @transform_3(%arg0: i32) -> (i32, i32) {
    %c0_i32 = arith.constant 0 : i32
    %c0_i32_0 = arith.constant 0 : i32
    %c0_i32_1 = arith.constant 0 : i32
    return %c0_i32, %c0_i32_0 : i32, i32
  }
  func.func @transform_4(%arg0: i32) -> (i32, i32) {
    %c0_i32 = arith.constant 0 : i32
    %c0_i32_0 = arith.constant 0 : i32
    %c0_i32_1 = arith.constant 0 : i32
    return %c0_i32, %c0_i32_0 : i32, i32
  }
  func.func @transform_5(%arg0: i32) -> (i32, i32) {
    %c0_i32 = arith.constant 0 : i32
    %c0_i32_0 = arith.constant 0 : i32
    %c0_i32_1 = arith.constant 0 : i32
    return %c0_i32, %c0_i32_0 : i32, i32
  }
  func.func @transform_6(%arg0: i32) -> (i32, i32) {
    %c0_i32 = arith.constant 0 : i32
    %c0_i32_0 = arith.constant 0 : i32
    %c0_i32_1 = arith.constant 0 : i32
    return %c0_i32, %c0_i32_0 : i32, i32
  }
  func.func @transform_7(%arg0: i32) -> (i32, i32) {
    %c0_i32 = arith.constant 0 : i32
    %c0_i32_0 = arith.constant 0 : i32
    return %arg0, %c0_i32 : i32, i32
  }
}

module attributes {stable_mosaic.version = 11 : i64} {
  func.func @_mlp_fused_kernel(%arg0: i32, %arg1: memref<8x128xbf16, #tpu.memory_space<vmem>>, %arg2: memref<128x128xbf16, #tpu.memory_space<vmem>>, %arg3: memref<1x128xbf16, #tpu.memory_space<vmem>>, %arg4: memref<128x128xbf16, #tpu.memory_space<vmem>>, %arg5: memref<1x128xbf16, #tpu.memory_space<vmem>>, %arg6: memref<128x128xbf16, #tpu.memory_space<vmem>>, %arg7: memref<1x128xbf16, #tpu.memory_space<vmem>>, %arg8: memref<8x128xf32, #tpu.memory_space<vmem>>) attributes {dimension_semantics = [#tpu.dimension_semantics<parallel>], iteration_bounds = array<i64: 2>, scalar_prefetch = 0 : i64, scratch_operands = 0 : i64, tpu.core_type = #tpu.core_type<tc>, window_params = [{transform_indices = @transform_0, window_bounds = array<i64: 8, 128>}, {pipeline_mode = #tpu.pipeline_mode<synchronous>, transform_indices = @transform_1, window_bounds = array<i64: 128, 128>}, {pipeline_mode = #tpu.pipeline_mode<synchronous>, transform_indices = @transform_2, window_bounds = array<i64: 1, 128>}, {pipeline_mode = #tpu.pipeline_mode<synchronous>, transform_indices = @transform_3, window_bounds = array<i64: 128, 128>}, {pipeline_mode = #tpu.pipeline_mode<synchronous>, transform_indices = @transform_4, window_bounds = array<i64: 1, 128>}, {pipeline_mode = #tpu.pipeline_mode<synchronous>, transform_indices = @transform_5, window_bounds = array<i64: 128, 128>}, {pipeline_mode = #tpu.pipeline_mode<synchronous>, transform_indices = @transform_6, window_bounds = array<i64: 1, 128>}, {transform_indices = @transform_7, window_bounds = array<i64: 8, 128>}]} {
    %c0 = arith.constant 0 : index
    %c0_0 = arith.constant 0 : index
    %0 = vector.load %arg1[%c0, %c0_0] : memref<8x128xbf16, #tpu.memory_space<vmem>>, vector<8x128xbf16>
    %c0_1 = arith.constant 0 : index
    %c0_2 = arith.constant 0 : index
    %1 = vector.load %arg2[%c0_1, %c0_2] : memref<128x128xbf16, #tpu.memory_space<vmem>>, vector<128x128xbf16>
    %cst = arith.constant dense<0.000000e+00> : vector<8x128xf32>
    %2 = tpu.matmul %0, %1, %cst {dimension_numbers = #tpu.dot_dimension_numbers<[1], [0], [0], [1], [0, 0, 1, 1], [], []>} : vector<8x128xbf16>, vector<128x128xbf16>, vector<8x128xf32> -> vector<8x128xf32>
    %c0_3 = arith.constant 0 : index
    %c0_4 = arith.constant 0 : index
    %3 = vector.load %arg3[%c0_3, %c0_4] : memref<1x128xbf16, #tpu.memory_space<vmem>>, vector<1x128xbf16>
    %4 = arith.extf %3 : vector<1x128xbf16> to vector<1x128xf32>
    %5 = vector.broadcast %4 : vector<1x128xf32> to vector<8x128xf32>
    %6 = arith.addf %2, %5 : vector<8x128xf32>
    %cst_5 = arith.constant 0.000000e+00 : f32
    %7 = vector.broadcast %cst_5 : f32 to vector<8x128xf32>
    %8 = arith.maximumf %6, %7 : vector<8x128xf32>
    %9 = arith.truncf %8 : vector<8x128xf32> to vector<8x128xbf16>
    %c0_6 = arith.constant 0 : index
    %c0_7 = arith.constant 0 : index
    %10 = vector.load %arg4[%c0_6, %c0_7] : memref<128x128xbf16, #tpu.memory_space<vmem>>, vector<128x128xbf16>
    %cst_8 = arith.constant dense<0.000000e+00> : vector<8x128xf32>
    %11 = tpu.matmul %9, %10, %cst_8 {dimension_numbers = #tpu.dot_dimension_numbers<[1], [0], [0], [1], [0, 0, 1, 1], [], []>} : vector<8x128xbf16>, vector<128x128xbf16>, vector<8x128xf32> -> vector<8x128xf32>
    %c0_9 = arith.constant 0 : index
    %c0_10 = arith.constant 0 : index
    %12 = vector.load %arg5[%c0_9, %c0_10] : memref<1x128xbf16, #tpu.memory_space<vmem>>, vector<1x128xbf16>
    %13 = arith.extf %12 : vector<1x128xbf16> to vector<1x128xf32>
    %14 = vector.broadcast %13 : vector<1x128xf32> to vector<8x128xf32>
    %15 = arith.addf %11, %14 : vector<8x128xf32>
    %cst_11 = arith.constant 0.000000e+00 : f32
    %16 = vector.broadcast %cst_11 : f32 to vector<8x128xf32>
    %17 = arith.maximumf %15, %16 : vector<8x128xf32>
    %18 = arith.truncf %17 : vector<8x128xf32> to vector<8x128xbf16>
    %c0_12 = arith.constant 0 : index
    %c0_13 = arith.constant 0 : index
    %19 = vector.load %arg6[%c0_12, %c0_13] : memref<128x128xbf16, #tpu.memory_space<vmem>>, vector<128x128xbf16>
    %cst_14 = arith.constant dense<0.000000e+00> : vector<8x128xf32>
    %20 = tpu.matmul %18, %19, %cst_14 {dimension_numbers = #tpu.dot_dimension_numbers<[1], [0], [0], [1], [0, 0, 1, 1], [], []>} : vector<8x128xbf16>, vector<128x128xbf16>, vector<8x128xf32> -> vector<8x128xf32>
    %c0_15 = arith.constant 0 : index
    %c0_16 = arith.constant 0 : index
    %21 = vector.load %arg7[%c0_15, %c0_16] : memref<1x128xbf16, #tpu.memory_space<vmem>>, vector<1x128xbf16>
    %22 = arith.extf %21 : vector<1x128xbf16> to vector<1x128xf32>
    %23 = vector.broadcast %22 : vector<1x128xf32> to vector<8x128xf32>
    %24 = arith.addf %20, %23 : vector<8x128xf32>
    %c0_17 = arith.constant 0 : index
    %c0_18 = arith.constant 0 : index
    %25 = vector.load %arg8[%c0_17, %c0_18] : memref<8x128xf32, #tpu.memory_space<vmem>>, vector<8x128xf32>
    tpu.vector_store %arg8[%c0_17, %c0_18], %24 {strides = array<i32>} : memref<8x128xf32, #tpu.memory_space<vmem>>, vector<8x128xf32>,
    return
  }
  func.func @transform_0(%arg0: i32) -> (i32, i32) {
    %c0_i32 = arith.constant 0 : i32
    %c0_i32_0 = arith.constant 0 : i32
    return %arg0, %c0_i32 : i32, i32
  }
  func.func @transform_1(%arg0: i32) -> (i32, i32) {
    %c0_i32 = arith.constant 0 : i32
    %c0_i32_0 = arith.constant 0 : i32
    %c0_i32_1 = arith.constant 0 : i32
    return %c0_i32, %c0_i32_0 : i32, i32
  }
  func.func @transform_2(%arg0: i32) -> (i32, i32) {
    %c0_i32 = arith.constant 0 : i32
    %c0_i32_0 = arith.constant 0 : i32
    %c0_i32_1 = arith.constant 0 : i32
    return %c0_i32, %c0_i32_0 : i32, i32
  }
  func.func @transform_3(%arg0: i32) -> (i32, i32) {
    %c0_i32 = arith.constant 0 : i32
    %c0_i32_0 = arith.constant 0 : i32
    %c0_i32_1 = arith.constant 0 : i32
    return %c0_i32, %c0_i32_0 : i32, i32
  }
  func.func @transform_4(%arg0: i32) -> (i32, i32) {
    %c0_i32 = arith.constant 0 : i32
    %c0_i32_0 = arith.constant 0 : i32
    %c0_i32_1 = arith.constant 0 : i32
    return %c0_i32, %c0_i32_0 : i32, i32
  }
  func.func @transform_5(%arg0: i32) -> (i32, i32) {
    %c0_i32 = arith.constant 0 : i32
    %c0_i32_0 = arith.constant 0 : i32
    %c0_i32_1 = arith.constant 0 : i32
    return %c0_i32, %c0_i32_0 : i32, i32
  }
  func.func @transform_6(%arg0: i32) -> (i32, i32) {
    %c0_i32 = arith.constant 0 : i32
    %c0_i32_0 = arith.constant 0 : i32
    %c0_i32_1 = arith.constant 0 : i32
    return %c0_i32, %c0_i32_0 : i32, i32
  }
  func.func @transform_7(%arg0: i32) -> (i32, i32) {
    %c0_i32 = arith.constant 0 : i32
    %c0_i32_0 = arith.constant 0 : i32
    return %arg0, %c0_i32 : i32, i32
  }
}

</mosaic_0001>

<llo_original>
// kernel: tpu_custom_call.1
$region0: #{tpu_custom_call.1}
  #allocation0 [shape = 'u32[]', space=smem, size = 0x4, offset = 0x4, fixed_abs, tag = 'smem constant byte address 0x4 - core index']
  #allocation1 [shape = 'u32[144,128]{1,0:T(1,128)}', space=vmem, size = 0x12000, scoped, tag = 'internal scratch']
  %s0 = inlined_call_operand.hbm [shape: bf16[16,128], index: 0, kind: input, shape index: {}]
  %s1 = inlined_call_operand.hbm [shape: bf16[128,128], index: 1, kind: input, shape index: {}]
  %s2 = inlined_call_operand.vmem [shape: bf16[1,128], index: 2, kind: input, shape index: {}]
  %s3 = inlined_call_operand.hbm [shape: bf16[128,128], index: 3, kind: input, shape index: {}]
  %s4 = inlined_call_operand.vmem [shape: bf16[1,128], index: 4, kind: input, shape index: {}]
  %s5 = inlined_call_operand.hbm [shape: bf16[128,128], index: 5, kind: input, shape index: {}]
  %s6 = inlined_call_operand.vmem [shape: bf16[1,128], index: 6, kind: input, shape index: {}]
  %s7 = inlined_call_operand.hbm [shape: f32[16,128], index: 7, kind: output, shape index: {}]
  %s8 = sld [smem:[#allocation0]]
  $region77: #{tpu_custom_call.1} parent=0
    _
  %s10 = ssub.s32 1, %s8
  %s11 = scalar_select 0, %s10, %s8
  $region1: #{tpu_custom_call.1} parent=0
    #allocation2 [shape = 'u8[4096]{0}', space=vmem, size = 0x1000, scoped, tag = 'input window, operand 0']
    #allocation3 [shape = 's32[2]{0}', space=sflag, size = 0x8, scoped, tag = 'scoped memory for tpu_custom_call.1']
    #allocation4 [shape = 's32[2]{0}', space=sflag, size = 0x8, scoped, tag = 'scoped memory for tpu_custom_call.1']
    #allocation5 [shape = 'u8[32768]{0}', space=vmem, size = 0x8000, scoped, tag = 'input window, operand 1, single buffered']
    #allocation6 [shape = 's32[1]{0}', space=sflag, size = 0x4, scoped, tag = 'scoped memory for tpu_custom_call.1']
    #allocation7 [shape = 'u8[32768]{0}', space=vmem, size = 0x8000, scoped, tag = 'input window, operand 3, single buffered']
    #allocation8 [shape = 'u8[32768]{0}', space=vmem, size = 0x8000, scoped, tag = 'input window, operand 5, single buffered']
    #allocation9 [shape = 's32[1]{0}', space=sflag, size = 0x4, scoped, tag = 'scoped memory for tpu_custom_call.1']
    #allocation10 [shape = 'u8[8192]{0}', space=vmem, size = 0x2000, scoped, tag = 'output window, operand 0']
    %12 = vsyncpa [#allocation3], 0
    %s13 = scalar_lea.sflag [#allocation3], 1
    %14 = vsyncpa %s13, 0
    %15 = vsyncpa [#allocation6], 0
    %16 = vsyncpa [#allocation9], 0
    %17 = vsyncpa [#allocation4], 0
    %s18 = scalar_lea.sflag [#allocation4], 1
    %19 = vsyncpa %s18, 0
    loop: start=0, step=1, limit=4
    $region2: #{tpu_custom_call.1} parent=1 // loop_pre_header
      _
    $region3: #{tpu_custom_call.1} parent=1 // loop_header
      %s21 = sphi 0, %s25
      %p22 = scmp.ge.s32.totalorder %s21, 4
      %s31 = sphi 0, %s33
      %s34 = sphi 0, %s31
      %s35 = sphi 0, %s34
      %s51 = sphi 0, %s35
      %s55 = sphi 0, %s55
      %s57 = sphi 0, %s55
      %s58 = sphi 0, %s57
      %s72 = sphi 0, %s58
      %s76 = sphi 0, %s76
      %s78 = sphi 0, %s76
      %s79 = sphi 0, %s78
      %s93 = sphi 0, %s79
      %s97 = sphi 0, %s97
      %s99 = sphi 0, %s97
      %s100 = sphi 0, %s99
      %s114 = sphi 0, %s100
      %s118 = sphi 0, %s118
      %s120 = sphi 0, %s118
      %s121 = sphi 0, %s120
      %s135 = sphi 0, %s121
      %s139 = sphi 0, %s139
      %s141 = sphi 0, %s139
      %s142 = sphi 0, %s141
      %s156 = sphi 0, %s142
      %s160 = sphi 0, %s160
      %s162 = sphi 0, %s160
      %s163 = sphi 0, %s162
      %s177 = sphi 0, %s163
      %s183 = sphi 0, %s185
      %s186 = sphi 0, %s183
      %s187 = sphi 0, %s186
      %s203 = sphi 0, %s187
    $region4: #{tpu_custom_call.1} parent=1 // loop_header_branch
      %24 = sbr.rel (%p22) target = $region8
    $region5: #{tpu_custom_call.1} parent=1 // loop_body
      %s26 = ssub.s32 %s21, 1
      %s27 = ssub.s32 %s21, 2
      %s28 = sadd.s32 %s21, 1
      %s29 = ssub.s32 %s21, %s28
      %p30 = scmp.eq.s32.totalorder %s29, 0
      %s32 = sadd.s32 %s31, 1
      %s33 = scalar_select %p30, %s31, %s32
      %p36 = pneg %p30
      %p37 = scmp.eq.s32.totalorder %s21, 1
      %p38 = por %p36, %p37
      %p39 = scmp.ne.s32.totalorder %s31, %s34
      %p40 = scmp.eq.s32.totalorder %s21, 0
      %p41 = por %p39, %p40
      %p42 = scmp.ne.s32.totalorder %s31, %s34
      %p43 = scmp.eq.s32.totalorder %s26, 1
      %p44 = por %p42, %p43
      %p45 = scmp.ne.s32.totalorder %s34, %s35
      %p46 = scmp.eq.s32.totalorder %s26, 0
      %p47 = por %p45, %p46
      %p48 = scmp.ne.s32.totalorder %s34, %s35
      %p49 = scmp.eq.s32.totalorder %s27, 1
      %p50 = por %p48, %p49
      %p52 = scmp.ne.s32.totalorder %s35, %s51
      %p53 = scmp.eq.s32.totalorder %s27, 0
      %p54 = por %p52, %p53
      %s56 = sadd.s32 %s55, 1
      %p59 = scmp.eq.s32.totalorder %s21, 1
      %p60 = scmp.ne.s32.totalorder %s55, %s57
      %p61 = scmp.eq.s32.totalorder %s21, 0
      %p62 = por %p60, %p61
      %p63 = scmp.ne.s32.totalorder %s55, %s57
      %p64 = scmp.eq.s32.totalorder %s26, 1
      %p65 = por %p63, %p64
      %p66 = scmp.ne.s32.totalorder %s57, %s58
      %p67 = scmp.eq.s32.totalorder %s26, 0
      %p68 = por %p66, %p67
      %p69 = scmp.ne.s32.totalorder %s57, %s58
      %p70 = scmp.eq.s32.totalorder %s27, 1
      %p71 = por %p69, %p70
      %p73 = scmp.ne.s32.totalorder %s58, %s72
      %p74 = scmp.eq.s32.totalorder %s27, 0
      %p75 = por %p73, %p74
      %s77 = sadd.s32 %s76, 1
      %p80 = scmp.eq.s32.totalorder %s21, 1
      %p81 = scmp.ne.s32.totalorder %s76, %s78
      %p82 = scmp.eq.s32.totalorder %s21, 0
      %p83 = por %p81, %p82
      %p84 = scmp.ne.s32.totalorder %s76, %s78
      %p85 = scmp.eq.s32.totalorder %s26, 1
      %p86 = por %p84, %p85
      %p87 = scmp.ne.s32.totalorder %s78, %s79
      %p88 = scmp.eq.s32.totalorder %s26, 0
      %p89 = por %p87, %p88
      %p90 = scmp.ne.s32.totalorder %s78, %s79
      %p91 = scmp.eq.s32.totalorder %s27, 1
      %p92 = por %p90, %p91
      %p94 = scmp.ne.s32.totalorder %s79, %s93
      %p95 = scmp.eq.s32.totalorder %s27, 0
      %p96 = por %p94, %p95
      %s98 = sadd.s32 %s97, 1
      %p101 = scmp.eq.s32.totalorder %s21, 1
      %p102 = scmp.ne.s32.totalorder %s97, %s99
      %p103 = scmp.eq.s32.totalorder %s21, 0
      %p104 = por %p102, %p103
      %p105 = scmp.ne.s32.totalorder %s97, %s99
      %p106 = scmp.eq.s32.totalorder %s26, 1
      %p107 = por %p105, %p106
      %p108 = scmp.ne.s32.totalorder %s99, %s100
      %p109 = scmp.eq.s32.totalorder %s26, 0
      %p110 = por %p108, %p109
      %p111 = scmp.ne.s32.totalorder %s99, %s100
      %p112 = scmp.eq.s32.totalorder %s27, 1
      %p113 = por %p111, %p112
      %p115 = scmp.ne.s32.totalorder %s100, %s114
      %p116 = scmp.eq.s32.totalorder %s27, 0
      %p117 = por %p115, %p116
      %s119 = sadd.s32 %s118, 1
      %p122 = scmp.eq.s32.totalorder %s21, 1
      %p123 = scmp.ne.s32.totalorder %s118, %s120
      %p124 = scmp.eq.s32.totalorder %s21, 0
      %p125 = por %p123, %p124
      %p126 = scmp.ne.s32.totalorder %s118, %s120
      %p127 = scmp.eq.s32.totalorder %s26, 1
      %p128 = por %p126, %p127
      %p129 = scmp.ne.s32.totalorder %s120, %s121
      %p130 = scmp.eq.s32.totalorder %s26, 0
      %p131 = por %p129, %p130
      %p132 = scmp.ne.s32.totalorder %s120, %s121
      %p133 = scmp.eq.s32.totalorder %s27, 1
      %p134 = por %p132, %p133
      %p136 = scmp.ne.s32.totalorder %s121, %s135
      %p137 = scmp.eq.s32.totalorder %s27, 0
      %p138 = por %p136, %p137
      %s140 = sadd.s32 %s139, 1
      %p143 = scmp.eq.s32.totalorder %s21, 1
      %p144 = scmp.ne.s32.totalorder %s139, %s141
      %p145 = scmp.eq.s32.totalorder %s21, 0
      %p146 = por %p144, %p145
      %p147 = scmp.ne.s32.totalorder %s139, %s141
      %p148 = scmp.eq.s32.totalorder %s26, 1
      %p149 = por %p147, %p148
      %p150 = scmp.ne.s32.totalorder %s141, %s142
      %p151 = scmp.eq.s32.totalorder %s26, 0
      %p152 = por %p150, %p151
      %p153 = scmp.ne.s32.totalorder %s141, %s142
      %p154 = scmp.eq.s32.totalorder %s27, 1
      %p155 = por %p153, %p154
      %p157 = scmp.ne.s32.totalorder %s142, %s156
      %p158 = scmp.eq.s32.totalorder %s27, 0
      %p159 = por %p157, %p158
      %s161 = sadd.s32 %s160, 1
      %p164 = scmp.eq.s32.totalorder %s21, 1
      %p165 = scmp.ne.s32.totalorder %s160, %s162
      %p166 = scmp.eq.s32.totalorder %s21, 0
      %p167 = por %p165, %p166
      %p168 = scmp.ne.s32.totalorder %s160, %s162
      %p169 = scmp.eq.s32.totalorder %s26, 1
      %p170 = por %p168, %p169
      %p171 = scmp.ne.s32.totalorder %s162, %s163
      %p172 = scmp.eq.s32.totalorder %s26, 0
      %p173 = por %p171, %p172
      %p174 = scmp.ne.s32.totalorder %s162, %s163
      %p175 = scmp.eq.s32.totalorder %s27, 1
      %p176 = por %p174, %p175
      %p178 = scmp.ne.s32.totalorder %s163, %s177
      %p179 = scmp.eq.s32.totalorder %s27, 0
      %p180 = por %p178, %p179
      %s181 = ssub.s32 %s21, %s28
      %p182 = scmp.eq.s32.totalorder %s181, 0
      %s184 = sadd.s32 %s183, 1
      %s185 = scalar_select %p182, %s183, %s184
      %p188 = pneg %p182
      %p189 = scmp.eq.s32.totalorder %s21, 1
      %p190 = por %p188, %p189
      %p191 = scmp.ne.s32.totalorder %s183, %s186
      %p192 = scmp.eq.s32.totalorder %s21, 0
      %p193 = por %p191, %p192
      %p194 = scmp.ne.s32.totalorder %s183, %s186
      %p195 = scmp.eq.s32.totalorder %s26, 1
      %p196 = por %p194, %p195
      %p197 = scmp.ne.s32.totalorder %s186, %s187
      %p198 = scmp.eq.s32.totalorder %s26, 0
      %p199 = por %p197, %p198
      %p200 = scmp.ne.s32.totalorder %s186, %s187
      %p201 = scmp.eq.s32.totalorder %s27, 1
      %p202 = por %p200, %p201
      %p204 = scmp.ne.s32.totalorder %s187, %s203
      %p205 = scmp.eq.s32.totalorder %s27, 0
      %p206 = por %p204, %p205
      %p207 = scmp.le.s32.totalorder 1, %s21
      %p208 = scmp.lt.s32.totalorder %s21, 3
      %p209 = pnand %p207, %p208
      %p210 = pneg %p209
      // Predicated region
      $region9: #{tpu_custom_call.1} parent=5 // pred_check
        _
      $region10: #{tpu_custom_call.1} parent=5 // pred_check_branch
        %212 = sbr.rel (%p209) target = $region12
      $region11: #{tpu_custom_call.1} parent=5 // pred_region
        %s213 = ssub.s32 %s21, 1
        // Predicated region
        $region13: #{tpu_custom_call.1} parent=11 // pred_check
          %p214 = pneg %p68
        $region14: #{tpu_custom_call.1} parent=11 // pred_check_branch
          %216 = sbr.rel (%p214) target = $region16
        $region15: #{tpu_custom_call.1} parent=11 // pred_region
          %s218 = ssub.s32 1024, 1024
          %219 = vsyncadd [#allocation6], %s218
          %s220 = sshll.u32 [#allocation5], 4
          %s221 = int_to_ptr.vmem [resolvable:$true] %s220
          %226 = dma.hbm_to_vmem [thread:$0]  %s1, 1024, %s221, [#allocation6], 64, 64, 4
        $region16: #{tpu_custom_call.1} parent=11 // pred_fallthru
          _
        // Predicated region
        $region17: #{tpu_custom_call.1} parent=11 // pred_check
          %p227 = pneg %p89
        $region18: #{tpu_custom_call.1} parent=11 // pred_check_branch
          %229 = sbr.rel (%p227) target = $region20
        $region19: #{tpu_custom_call.1} parent=11 // pred_region
          _
        $region20: #{tpu_custom_call.1} parent=11 // pred_fallthru
          _
        // Predicated region
        $region21: #{tpu_custom_call.1} parent=11 // pred_check
          %p230 = pneg %p110
        $region22: #{tpu_custom_call.1} parent=11 // pred_check_branch
          %232 = sbr.rel (%p230) target = $region24
        $region23: #{tpu_custom_call.1} parent=11 // pred_region
          %s234 = ssub.s32 1024, 1024
          %235 = vsyncadd [#allocation6], %s234
          %s236 = sshll.u32 [#allocation7], 4
          %s237 = int_to_ptr.vmem [resolvable:$true] %s236
          %242 = dma.hbm_to_vmem [thread:$0]  %s3, 1024, %s237, [#allocation6], 64, 64, 4
        $region24: #{tpu_custom_call.1} parent=11 // pred_fallthru
          _
        // Predicated region
        $region25: #{tpu_custom_call.1} parent=11 // pred_check
          %p243 = pneg %p131
        $region26: #{tpu_custom_call.1} parent=11 // pred_check_branch
          %245 = sbr.rel (%p243) target = $region28
        $region27: #{tpu_custom_call.1} parent=11 // pred_region
          _
        $region28: #{tpu_custom_call.1} parent=11 // pred_fallthru
          _
        // Predicated region
        $region29: #{tpu_custom_call.1} parent=11 // pred_check
          %p246 = pneg %p152
        $region30: #{tpu_custom_call.1} parent=11 // pred_check_branch
          %248 = sbr.rel (%p246) target = $region32
        $region31: #{tpu_custom_call.1} parent=11 // pred_region
          %s250 = ssub.s32 1024, 1024
          %251 = vsyncadd [#allocation9], %s250
          %s252 = sshll.u32 [#allocation8], 4
          %s253 = int_to_ptr.vmem [resolvable:$true] %s252
          %258 = dma.hbm_to_vmem [thread:$0]  %s5, 1024, %s253, [#allocation9], 64, 64, 4
        $region32: #{tpu_custom_call.1} parent=11 // pred_fallthru
          _
        // Predicated region
        $region33: #{tpu_custom_call.1} parent=11 // pred_check
          %p259 = pneg %p173
        $region34: #{tpu_custom_call.1} parent=11 // pred_check_branch
          %261 = sbr.rel (%p259) target = $region36
        $region35: #{tpu_custom_call.1} parent=11 // pred_region
          _
        $region36: #{tpu_custom_call.1} parent=11 // pred_fallthru
          _
      $region12: #{tpu_custom_call.1} parent=5 // pred_fallthru
        _
      %p262 = scmp.lt.s32.totalorder %s21, 2
      // Predicated region
      $region37: #{tpu_custom_call.1} parent=5 // pred_check
        %p263 = pneg %p262
      $region38: #{tpu_custom_call.1} parent=5 // pred_check_branch
        %265 = sbr.rel (%p263) target = $region40
      $region39: #{tpu_custom_call.1} parent=5 // pred_region
        // Predicated region
        $region41: #{tpu_custom_call.1} parent=39 // pred_check
          %p266 = pneg %p41
        $region42: #{tpu_custom_call.1} parent=39 // pred_check_branch
          %268 = sbr.rel (%p266) target = $region44
        $region43: #{tpu_custom_call.1} parent=39 // pred_region
          %s269 = sand.u32 %s31, 1
          %s270 = scalar_lea.sflag [#allocation3], %s269
          %s271 = sand.u32 %s31, 1
          %s272 = smul.addr %s271, 4
          %s273 = scalar_lea.vmem [#allocation2], %s272
          %s275 = ssub.s32 64, 64
          %276 = vsyncadd %s270, %s275
          %s277 = smul.addr %s21, 64
          %s278 = scalar_lea.hbm %s0, %s277
          %s280 = sshll.u32 %s273, 4
          %s281 = int_to_ptr.vmem [resolvable:$true] %s280
          %283 = dma.hbm_to_vmem [thread:$0]  %s278, 64, %s281, %s270
        $region44: #{tpu_custom_call.1} parent=39 // pred_fallthru
          _
      $region40: #{tpu_custom_call.1} parent=5 // pred_fallthru
        _
      %p284 = scmp.le.s32.totalorder 1, %s21
      %p285 = scmp.lt.s32.totalorder %s21, 3
      %p286 = pnand %p284, %p285
      %p287 = pneg %p286
      // Predicated region
      $region45: #{tpu_custom_call.1} parent=5 // pred_check
        _
      $region46: #{tpu_custom_call.1} parent=5 // pred_check_branch
        %289 = sbr.rel (%p286) target = $region48
      $region47: #{tpu_custom_call.1} parent=5 // pred_region
        %s290 = ssub.s32 %s21, 1
        %s291 = sand.u32 %s34, 1
        %s292 = scalar_lea.sflag [#allocation3], %s291
        %s293 = sand.u32 %s34, 1
        %s294 = smul.addr %s293, 4
        %s295 = scalar_lea.vmem [#allocation2], %s294
        // Predicated region
        $region49: #{tpu_custom_call.1} parent=47 // pred_check
          %p296 = pneg %p47
        $region50: #{tpu_custom_call.1} parent=47 // pred_check_branch
          %298 = sbr.rel (%p296) target = $region52
        $region51: #{tpu_custom_call.1} parent=47 // pred_region
          %299 = dma.done %s292, 64
        $region52: #{tpu_custom_call.1} parent=47 // pred_fallthru
          _
        // Predicated region
        $region53: #{tpu_custom_call.1} parent=47 // pred_check
          %p300 = pneg %p68
        $region54: #{tpu_custom_call.1} parent=47 // pred_check_branch
          %302 = sbr.rel (%p300) target = $region56
        $region55: #{tpu_custom_call.1} parent=47 // pred_region
          %303 = dma.done [#allocation6], 1024
        $region56: #{tpu_custom_call.1} parent=47 // pred_fallthru
          _
        // Predicated region
        $region57: #{tpu_custom_call.1} parent=47 // pred_check
          %p304 = pneg %p110
        $region58: #{tpu_custom_call.1} parent=47 // pred_check_branch
          %306 = sbr.rel (%p304) target = $region60
        $region59: #{tpu_custom_call.1} parent=47 // pred_region
          %307 = dma.done [#allocation6], 1024
        $region60: #{tpu_custom_call.1} parent=47 // pred_fallthru
          _
        // Predicated region
        $region61: #{tpu_custom_call.1} parent=47 // pred_check
          %p308 = pneg %p152
        $region62: #{tpu_custom_call.1} parent=47 // pred_check_branch
          %310 = sbr.rel (%p308) target = $region64
        $region63: #{tpu_custom_call.1} parent=47 // pred_region
          %311 = dma.done [#allocation9], 1024
        $region64: #{tpu_custom_call.1} parent=47 // pred_fallthru
          _
        %s312 = sand.u32 %s34, 1
        %s313 = scalar_lea.sflag [#allocation3], %s312
        %s314 = sand.u32 %s34, 1
        %s315 = smul.addr %s314, 4
        %s316 = scalar_lea.vmem [#allocation2], %s315
        %p317 = pneg %p47
        %p318 = pneg %p44
        %p319 = pneg %p68
        %p320 = pneg %p65
        %p321 = pneg %p89
        %p322 = pneg %p86
        %p323 = pneg %p110
        %p324 = pneg %p107
        %p325 = pneg %p131
        %p326 = pneg %p128
        %p327 = pneg %p152
        %p328 = pneg %p149
        %p329 = pneg %p173
        %p330 = pneg %p170
        %p331 = pneg %p199
        %p332 = pneg %p196
        %s333 = sand.u32 %s186, 1
        %s334 = scalar_lea.sflag [#allocation4], %s333
        %s335 = sand.u32 %s186, 1
        %s336 = smul.addr %s335, 8
        %s337 = scalar_lea.vmem [#allocation10], %s336
        %v339 = vld [vmem:[%s295] sm:$0xf]
        %v340 = vld [vmem:[#allocation5] sm:$0xf]
        %v341 = vld [vmem:[#allocation5 + $0x4] sm:$0xf]
        %v342 = vld [vmem:[#allocation5 + $0x8] sm:$0xf]
        %v343 = vld [vmem:[#allocation5 + $0xc] sm:$0xf]
        %v344 = vld [vmem:[#allocation5 + $0x10] sm:$0xf]
        %v345 = vld [vmem:[#allocation5 + $0x14] sm:$0xf]
        %v346 = vld [vmem:[#allocation5 + $0x18] sm:$0xf]
        %v347 = vld [vmem:[#allocation5 + $0x1c] sm:$0xf]
        %v348 = vld [vmem:[#allocation5 + $0x20] sm:$0xf]
        %v349 = vld [vmem:[#allocation5 + $0x24] sm:$0xf]
        %v350 = vld [vmem:[#allocation5 + $0x28] sm:$0xf]
        %v351 = vld [vmem:[#allocation5 + $0x2c] sm:$0xf]
        %v352 = vld [vmem:[#allocation5 + $0x30] sm:$0xf]
        %v353 = vld [vmem:[#allocation5 + $0x34] sm:$0xf]
        %v354 = vld [vmem:[#allocation5 + $0x38] sm:$0xf]
        %v355 = vld [vmem:[#allocation5 + $0x3c] sm:$0xf]
        %v356 = vld [vmem:[%s2] sm:$0x1]
        %v357 = vunpack.c.l.bf16 %v356
        %v358 = vlaneseq
        %v359 = vshrl.u32 %v358, 7
        %v360 = vsub.s32 0, %v359
        %v361 = vrot.slane %v357, %v360
        %v378 = vunpack.c.l.b16 %v340
        %v379 = vunpack.c.l.b16 %v341
        %v380 = vunpack.c.l.b16 %v342
        %v381 = vunpack.c.l.b16 %v343
        %v382 = vunpack.c.l.b16 %v344
        %v383 = vunpack.c.l.b16 %v345
        %v384 = vunpack.c.l.b16 %v346
        %v385 = vunpack.c.l.b16 %v347
        %v386 = vunpack.c.l.b16 %v348
        %v387 = vunpack.c.l.b16 %v349
        %v388 = vunpack.c.l.b16 %v350
        %v389 = vunpack.c.l.b16 %v351
        %v390 = vunpack.c.l.b16 %v352
        %v391 = vunpack.c.l.b16 %v353
        %v392 = vunpack.c.l.b16 %v354
        %v393 = vunpack.c.l.b16 %v355
        %v394 = vpack.c.b16 %v379, %v378
        %v395 = vpack.c.b16 %v381, %v380
        %v396 = vpack.c.b16 %v383, %v382
        %v397 = vpack.c.b16 %v385, %v384
        %v398 = vpack.c.b16 %v387, %v386
        %v399 = vpack.c.b16 %v389, %v388
        %v400 = vpack.c.b16 %v391, %v390
        %v401 = vpack.c.b16 %v393, %v392
        %410 = vmatprep.subr.bf16.mxu0 0
        %411 = vmatpush1.bf16.msra.mxu0 %v401
        %412 = vmatprep.subr.bf16.mxu0 0
        %413 = vmatpush1.bf16.msra.mxu0 %v400
        %414 = vmatprep.subr.bf16.mxu0 0
        %415 = vmatpush1.bf16.msra.mxu0 %v399
        %416 = vmatprep.subr.bf16.mxu0 0
        %417 = vmatpush1.bf16.msra.mxu0 %v398
        %418 = vmatprep.subr.bf16.mxu0 0
        %419 = vmatpush1.bf16.msra.mxu0 %v397
        %420 = vmatprep.subr.bf16.mxu0 0
        %421 = vmatpush1.bf16.msra.mxu0 %v396
        %422 = vmatprep.subr.bf16.mxu0 0
        %423 = vmatpush1.bf16.msra.mxu0 %v395
        %424 = vmatprep.subr.bf16.mxu0 0
        %425 = vmatpush1.bf16.msra.mxu0 %v394
        %426 = vmatprep.subr.bf16.mxu0 0
        %427 = vmatpush2.bf16.msra.mxu0 0
        %428 = vmatprep.subr.bf16.mxu0 0
        %429 = vmatpush2.bf16.msra.mxu0 0
        %430 = vmatprep.subr.bf16.mxu0 0
        %431 = vmatpush2.bf16.msra.mxu0 0
        %432 = vmatprep.subr.bf16.mxu0 0
        %433 = vmatpush2.bf16.msra.mxu0 0
        %434 = vmatprep.subr.bf16.mxu0 0
        %435 = vmatpush2.bf16.msra.mxu0 0
        %436 = vmatprep.subr.bf16.mxu0 0
        %437 = vmatpush2.bf16.msra.mxu0 0
        %438 = vmatprep.subr.bf16.mxu0 0
        %439 = vmatpush2.bf16.msra.mxu0 0
        %440 = vmatprep.subr.bf16.mxu0 0
        %441 = vmatpush2.bf16.msra.mxu0 0
        %442 = vmatprep.mubr.bf16.mxu0 0
        %443 = vmatmul.mubr.bf16.gmra.mxu0 %v339
        %v444 = vpop.f32.mrf.mxu0
        %v445 = vadd.f32 %v361, %v444
        %v446 = vpop.f32.mrf.mxu0
        %v447 = vpop.f32.mrf.mxu0
        %v448 = vpop.f32.mrf.mxu0
        %449 = vdwg.mxu0
        %v450 = vmax.f32 %v445, 0.0
        %v451 = vpack.c.bf16 %v450, %v450
        %v452 = vld [vmem:[#allocation7] sm:$0xf]
        %v453 = vld [vmem:[#allocation7 + $0x4] sm:$0xf]
        %v454 = vld [vmem:[#allocation7 + $0x8] sm:$0xf]
        %v455 = vld [vmem:[#allocation7 + $0xc] sm:$0xf]
        %v456 = vld [vmem:[#allocation7 + $0x10] sm:$0xf]
        %v457 = vld [vmem:[#allocation7 + $0x14] sm:$0xf]
        %v458 = vld [vmem:[#allocation7 + $0x18] sm:$0xf]
        %v459 = vld [vmem:[#allocation7 + $0x1c] sm:$0xf]
        %v460 = vld [vmem:[#allocation7 + $0x20] sm:$0xf]
        %v461 = vld [vmem:[#allocation7 + $0x24] sm:$0xf]
        %v462 = vld [vmem:[#allocation7 + $0x28] sm:$0xf]
        %v463 = vld [vmem:[#allocation7 + $0x2c] sm:$0xf]
        %v464 = vld [vmem:[#allocation7 + $0x30] sm:$0xf]
        %v465 = vld [vmem:[#allocation7 + $0x34] sm:$0xf]
        %v466 = vld [vmem:[#allocation7 + $0x38] sm:$0xf]
        %v467 = vld [vmem:[#allocation7 + $0x3c] sm:$0xf]
        %v468 = vld [vmem:[%s4] sm:$0x1]
        %v469 = vunpack.c.l.bf16 %v468
        %v470 = vlaneseq
        %v471 = vshrl.u32 %v470, 7
        %v472 = vsub.s32 0, %v471
        %v473 = vrot.slane %v469, %v472
        %v490 = vunpack.c.l.b16 %v452
        %v491 = vunpack.c.l.b16 %v453
        %v492 = vunpack.c.l.b16 %v454
        %v493 = vunpack.c.l.b16 %v455
        %v494 = vunpack.c.l.b16 %v456
        %v495 = vunpack.c.l.b16 %v457
        %v496 = vunpack.c.l.b16 %v458
        %v497 = vunpack.c.l.b16 %v459
        %v498 = vunpack.c.l.b16 %v460
        %v499 = vunpack.c.l.b16 %v461
        %v500 = vunpack.c.l.b16 %v462
        %v501 = vunpack.c.l.b16 %v463
        %v502 = vunpack.c.l.b16 %v464
        %v503 = vunpack.c.l.b16 %v465
        %v504 = vunpack.c.l.b16 %v466
        %v505 = vunpack.c.l.b16 %v467
        %v506 = vpack.c.b16 %v491, %v490
        %v507 = vpack.c.b16 %v493, %v492
        %v508 = vpack.c.b16 %v495, %v494
        %v509 = vpack.c.b16 %v497, %v496
        %v510 = vpack.c.b16 %v499, %v498
        %v511 = vpack.c.b16 %v501, %v500
        %v512 = vpack.c.b16 %v503, %v502
        %v513 = vpack.c.b16 %v505, %v504
        %522 = vmatprep.subr.bf16.mxu0 0
        %523 = vmatpush1.bf16.msra.mxu0 %v513
        %524 = vmatprep.subr.bf16.mxu0 0
        %525 = vmatpush1.bf16.msra.mxu0 %v512
        %526 = vmatprep.subr.bf16.mxu0 0
        %527 = vmatpush1.bf16.msra.mxu0 %v511
        %528 = vmatprep.subr.bf16.mxu0 0
        %529 = vmatpush1.bf16.msra.mxu0 %v510
        %530 = vmatprep.subr.bf16.mxu0 0
        %531 = vmatpush1.bf16.msra.mxu0 %v509
        %532 = vmatprep.subr.bf16.mxu0 0
        %533 = vmatpush1.bf16.msra.mxu0 %v508
        %534 = vmatprep.subr.bf16.mxu0 0
        %535 = vmatpush1.bf16.msra.mxu0 %v507
        %536 = vmatprep.subr.bf16.mxu0 0
        %537 = vmatpush1.bf16.msra.mxu0 %v506
        %538 = vmatprep.subr.bf16.mxu0 0
        %539 = vmatpush2.bf16.msra.mxu0 0
        %540 = vmatprep.subr.bf16.mxu0 0
        %541 = vmatpush2.bf16.msra.mxu0 0
        %542 = vmatprep.subr.bf16.mxu0 0
        %543 = vmatpush2.bf16.msra.mxu0 0
        %544 = vmatprep.subr.bf16.mxu0 0
        %545 = vmatpush2.bf16.msra.mxu0 0
        %546 = vmatprep.subr.bf16.mxu0 0
        %547 = vmatpush2.bf16.msra.mxu0 0
        %548 = vmatprep.subr.bf16.mxu0 0
        %549 = vmatpush2.bf16.msra.mxu0 0
        %550 = vmatprep.subr.bf16.mxu0 0
        %551 = vmatpush2.bf16.msra.mxu0 0
        %552 = vmatprep.subr.bf16.mxu0 0
        %553 = vmatpush2.bf16.msra.mxu0 0
        %554 = vmatprep.mubr.bf16.mxu0 0
        %555 = vmatmul.mubr.bf16.gmra.mxu0 %v451
        %v556 = vpop.f32.mrf.mxu0
        %v557 = vadd.f32 %v473, %v556
        %v558 = vpop.f32.mrf.mxu0
        %v559 = vpop.f32.mrf.mxu0
        %v560 = vpop.f32.mrf.mxu0
        %561 = vdwg.mxu0
        %v562 = vmax.f32 %v557, 0.0
        %v563 = vpack.c.bf16 %v562, %v562
        %v564 = vld [vmem:[#allocation8] sm:$0xf]
        %v565 = vld [vmem:[#allocation8 + $0x4] sm:$0xf]
        %v566 = vld [vmem:[#allocation8 + $0x8] sm:$0xf]
        %v567 = vld [vmem:[#allocation8 + $0xc] sm:$0xf]
        %v568 = vld [vmem:[#allocation8 + $0x10] sm:$0xf]
        %v569 = vld [vmem:[#allocation8 + $0x14] sm:$0xf]
        %v570 = vld [vmem:[#allocation8 + $0x18] sm:$0xf]
        %v571 = vld [vmem:[#allocation8 + $0x1c] sm:$0xf]
        %v572 = vld [vmem:[#allocation8 + $0x20] sm:$0xf]
        %v573 = vld [vmem:[#allocation8 + $0x24] sm:$0xf]
        %v574 = vld [vmem:[#allocation8 + $0x28] sm:$0xf]
        %v575 = vld [vmem:[#allocation8 + $0x2c] sm:$0xf]
        %v576 = vld [vmem:[#allocation8 + $0x30] sm:$0xf]
        %v577 = vld [vmem:[#allocation8 + $0x34] sm:$0xf]
        %v578 = vld [vmem:[#allocation8 + $0x38] sm:$0xf]
        %v579 = vld [vmem:[#allocation8 + $0x3c] sm:$0xf]
        %v580 = vld [vmem:[%s6] sm:$0x1]
        %v581 = vunpack.c.l.bf16 %v580
        %v582 = vlaneseq
        %v583 = vshrl.u32 %v582, 7
        %v584 = vsub.s32 0, %v583
        %v585 = vrot.slane %v581, %v584
        %v602 = vunpack.c.l.b16 %v564
        %v603 = vunpack.c.l.b16 %v565
        %v604 = vunpack.c.l.b16 %v566
        %v605 = vunpack.c.l.b16 %v567
        %v606 = vunpack.c.l.b16 %v568
        %v607 = vunpack.c.l.b16 %v569
        %v608 = vunpack.c.l.b16 %v570
        %v609 = vunpack.c.l.b16 %v571
        %v610 = vunpack.c.l.b16 %v572
        %v611 = vunpack.c.l.b16 %v573
        %v612 = vunpack.c.l.b16 %v574
        %v613 = vunpack.c.l.b16 %v575
        %v614 = vunpack.c.l.b16 %v576
        %v615 = vunpack.c.l.b16 %v577
        %v616 = vunpack.c.l.b16 %v578
        %v617 = vunpack.c.l.b16 %v579
        %v618 = vpack.c.b16 %v603, %v602
        %v619 = vpack.c.b16 %v605, %v604
        %v620 = vpack.c.b16 %v607, %v606
        %v621 = vpack.c.b16 %v609, %v608
        %v622 = vpack.c.b16 %v611, %v610
        %v623 = vpack.c.b16 %v613, %v612
        %v624 = vpack.c.b16 %v615, %v614
        %v625 = vpack.c.b16 %v617, %v616
        %634 = vmatprep.subr.bf16.mxu0 0
        %635 = vmatpush1.bf16.msra.mxu0 %v625
        %636 = vmatprep.subr.bf16.mxu0 0
        %637 = vmatpush1.bf16.msra.mxu0 %v624
        %638 = vmatprep.subr.bf16.mxu0 0
        %639 = vmatpush1.bf16.msra.mxu0 %v623
        %640 = vmatprep.subr.bf16.mxu0 0
        %641 = vmatpush1.bf16.msra.mxu0 %v622
        %642 = vmatprep.subr.bf16.mxu0 0
        %643 = vmatpush1.bf16.msra.mxu0 %v621
        %644 = vmatprep.subr.bf16.mxu0 0
        %645 = vmatpush1.bf16.msra.mxu0 %v620
        %646 = vmatprep.subr.bf16.mxu0 0
        %647 = vmatpush1.bf16.msra.mxu0 %v619
        %648 = vmatprep.subr.bf16.mxu0 0
        %649 = vmatpush1.bf16.msra.mxu0 %v618
        %650 = vmatprep.subr.bf16.mxu0 0
        %651 = vmatpush2.bf16.msra.mxu0 0
        %652 = vmatprep.subr.bf16.mxu0 0
        %653 = vmatpush2.bf16.msra.mxu0 0
        %654 = vmatprep.subr.bf16.mxu0 0
        %655 = vmatpush2.bf16.msra.mxu0 0
        %656 = vmatprep.subr.bf16.mxu0 0
        %657 = vmatpush2.bf16.msra.mxu0 0
        %658 = vmatprep.subr.bf16.mxu0 0
        %659 = vmatpush2.bf16.msra.mxu0 0
        %660 = vmatprep.subr.bf16.mxu0 0
        %661 = vmatpush2.bf16.msra.mxu0 0
        %662 = vmatprep.subr.bf16.mxu0 0
        %663 = vmatpush2.bf16.msra.mxu0 0
        %664 = vmatprep.subr.bf16.mxu0 0
        %665 = vmatpush2.bf16.msra.mxu0 0
        %666 = vmatprep.mubr.bf16.mxu0 0
        %667 = vmatmul.mubr.bf16.gmra.mxu0 %v563
        %v668 = vpop.f32.mrf.mxu0
        %v669 = vadd.f32 %v585, %v668
        %v670 = vpop.f32.mrf.mxu0
        %v671 = vpop.f32.mrf.mxu0
        %v672 = vpop.f32.mrf.mxu0
        %673 = vdwg.mxu0
        %674 = vst [vmem:[%s337] sm:$0xff] %v669
        %s675 = sand.u32 %s186, 1
        %s676 = scalar_lea.sflag [#allocation4], %s675
        %s677 = sand.u32 %s186, 1
        %s678 = smul.addr %s677, 8
        %s679 = scalar_lea.vmem [#allocation10], %s678
        // Predicated region
        $region65: #{tpu_custom_call.1} parent=47 // pred_check
          %p680 = pneg %p196
        $region66: #{tpu_custom_call.1} parent=47 // pred_check_branch
          %682 = sbr.rel (%p680) target = $region68
        $region67: #{tpu_custom_call.1} parent=47 // pred_region
          %s684 = ssub.s32 128, 128
          %685 = vsyncadd %s676, %s684
          %s686 = smul.addr %s26, 128
          %s687 = scalar_lea.hbm %s7, %s686
          %s689 = sshll.u32 %s679, 4
          %s690 = int_to_ptr.vmem [resolvable:$true] %s689
          %692 = dma.vmem_to_hbm [thread:$0]  %s690, 128, %s687, %s676
        $region68: #{tpu_custom_call.1} parent=47 // pred_fallthru
          _
      $region48: #{tpu_custom_call.1} parent=5 // pred_fallthru
        _
      %p693 = scmp.le.s32.totalorder 2, %s21
      // Predicated region
      $region69: #{tpu_custom_call.1} parent=5 // pred_check
        %p694 = pneg %p693
      $region70: #{tpu_custom_call.1} parent=5 // pred_check_branch
        %696 = sbr.rel (%p694) target = $region72
      $region71: #{tpu_custom_call.1} parent=5 // pred_region
        %s697 = ssub.s32 %s21, 2
        // Predicated region
        $region73: #{tpu_custom_call.1} parent=71 // pred_check
          %p698 = pneg %p202
        $region74: #{tpu_custom_call.1} parent=71 // pred_check_branch
          %700 = sbr.rel (%p698) target = $region76
        $region75: #{tpu_custom_call.1} parent=71 // pred_region
          %s701 = sand.u32 %s187, 1
          %s702 = scalar_lea.sflag [#allocation4], %s701
          %s703 = sand.u32 %s187, 1
          %s704 = smul.addr %s703, 8
          %s705 = scalar_lea.vmem [#allocation10], %s704
          %706 = dma.done %s702, 128
        $region76: #{tpu_custom_call.1} parent=71 // pred_fallthru
          _
      $region72: #{tpu_custom_call.1} parent=5 // pred_fallthru
        _
    $region6: #{tpu_custom_call.1} parent=1 // loop_footer
      %s25 = sadd.s32 1, %s21
    $region7: #{tpu_custom_call.1} parent=1 // loop_footer_branch
      %20 = sbr.rel target = $region3
    $region8: #{tpu_custom_call.1} parent=1 // loop_exit
      _
    %707 = vsyncpa [#allocation3], 1
    %s708 = scalar_lea.sflag [#allocation3], 1
    %709 = vsyncpa %s708, 1
    %710 = vsyncpa [#allocation6], 1
    %711 = vsyncpa [#allocation9], 1
    %712 = vsyncpa [#allocation4], 1
    %s713 = scalar_lea.sflag [#allocation4], 1
    %714 = vsyncpa %s713, 1

// kernel: tpu_custom_call.1
$region0: #{tpu_custom_call.1}
  #allocation0 [shape = 'u32[]', space=smem, size = 0x4, offset = 0x4, fixed_abs, tag = 'smem constant byte address 0x4 - core index']
  #allocation1 [shape = 'u32[144,128]{1,0:T(1,128)}', space=vmem, size = 0x12000, scoped, tag = 'internal scratch']
  %s0 = inlined_call_operand.hbm [shape: bf16[16,128], index: 0, kind: input, shape index: {}]
  %s1 = inlined_call_operand.hbm [shape: bf16[128,128], index: 1, kind: input, shape index: {}]
  %s2 = inlined_call_operand.vmem [shape: bf16[1,128], index: 2, kind: input, shape index: {}]
  %s3 = inlined_call_operand.hbm [shape: bf16[128,128], index: 3, kind: input, shape index: {}]
  %s4 = inlined_call_operand.vmem [shape: bf16[1,128], index: 4, kind: input, shape index: {}]
  %s5 = inlined_call_operand.hbm [shape: bf16[128,128], index: 5, kind: input, shape index: {}]
  %s6 = inlined_call_operand.vmem [shape: bf16[1,128], index: 6, kind: input, shape index: {}]
  %s7 = inlined_call_operand.hbm [shape: f32[16,128], index: 7, kind: output, shape index: {}]
  %s8 = sld [smem:[#allocation0]]
  $region77: #{tpu_custom_call.1} parent=0
    _
  %s10 = ssub.s32 1, %s8
  %s11 = scalar_select 0, %s10, %s8
  $region1: #{tpu_custom_call.1} parent=0
    #allocation2 [shape = 'u8[4096]{0}', space=vmem, size = 0x1000, scoped, tag = 'input window, operand 0']
    #allocation3 [shape = 's32[2]{0}', space=sflag, size = 0x8, scoped, tag = 'scoped memory for tpu_custom_call.1']
    #allocation4 [shape = 's32[2]{0}', space=sflag, size = 0x8, scoped, tag = 'scoped memory for tpu_custom_call.1']
    #allocation5 [shape = 'u8[32768]{0}', space=vmem, size = 0x8000, scoped, tag = 'input window, operand 1, single buffered']
    #allocation6 [shape = 's32[1]{0}', space=sflag, size = 0x4, scoped, tag = 'scoped memory for tpu_custom_call.1']
    #allocation7 [shape = 'u8[32768]{0}', space=vmem, size = 0x8000, scoped, tag = 'input window, operand 3, single buffered']
    #allocation8 [shape = 'u8[32768]{0}', space=vmem, size = 0x8000, scoped, tag = 'input window, operand 5, single buffered']
    #allocation9 [shape = 's32[1]{0}', space=sflag, size = 0x4, scoped, tag = 'scoped memory for tpu_custom_call.1']
    #allocation10 [shape = 'u8[8192]{0}', space=vmem, size = 0x2000, scoped, tag = 'output window, operand 0']
    %12 = vsyncpa [#allocation3], 0
    %s13 = scalar_lea.sflag [#allocation3], 1
    %14 = vsyncpa %s13, 0
    %15 = vsyncpa [#allocation6], 0
    %16 = vsyncpa [#allocation9], 0
    %17 = vsyncpa [#allocation4], 0
    %s18 = scalar_lea.sflag [#allocation4], 1
    %19 = vsyncpa %s18, 0
    loop: start=0, step=1, limit=4
    $region2: #{tpu_custom_call.1} parent=1 // loop_pre_header
      _
    $region3: #{tpu_custom_call.1} parent=1 // loop_header
      %s21 = sphi 0, %s25
      %p22 = scmp.ge.s32.totalorder %s21, 4
      %s31 = sphi 0, %s33
      %s34 = sphi 0, %s31
      %s35 = sphi 0, %s34
      %s51 = sphi 0, %s35
      %s55 = sphi 0, %s55
      %s57 = sphi 0, %s55
      %s58 = sphi 0, %s57
      %s72 = sphi 0, %s58
      %s76 = sphi 0, %s76
      %s78 = sphi 0, %s76
      %s79 = sphi 0, %s78
      %s93 = sphi 0, %s79
      %s97 = sphi 0, %s97
      %s99 = sphi 0, %s97
      %s100 = sphi 0, %s99
      %s114 = sphi 0, %s100
      %s118 = sphi 0, %s118
      %s120 = sphi 0, %s118
      %s121 = sphi 0, %s120
      %s135 = sphi 0, %s121
      %s139 = sphi 0, %s139
      %s141 = sphi 0, %s139
      %s142 = sphi 0, %s141
      %s156 = sphi 0, %s142
      %s160 = sphi 0, %s160
      %s162 = sphi 0, %s160
      %s163 = sphi 0, %s162
      %s177 = sphi 0, %s163
      %s183 = sphi 0, %s185
      %s186 = sphi 0, %s183
      %s187 = sphi 0, %s186
      %s203 = sphi 0, %s187
    $region4: #{tpu_custom_call.1} parent=1 // loop_header_branch
      %24 = sbr.rel (%p22) target = $region8
    $region5: #{tpu_custom_call.1} parent=1 // loop_body
      %s26 = ssub.s32 %s21, 1
      %s27 = ssub.s32 %s21, 2
      %s28 = sadd.s32 %s21, 1
      %s29 = ssub.s32 %s21, %s28
      %p30 = scmp.eq.s32.totalorder %s29, 0
      %s32 = sadd.s32 %s31, 1
      %s33 = scalar_select %p30, %s31, %s32
      %p36 = pneg %p30
      %p37 = scmp.eq.s32.totalorder %s21, 1
      %p38 = por %p36, %p37
      %p39 = scmp.ne.s32.totalorder %s31, %s34
      %p40 = scmp.eq.s32.totalorder %s21, 0
      %p41 = por %p39, %p40
      %p42 = scmp.ne.s32.totalorder %s31, %s34
      %p43 = scmp.eq.s32.totalorder %s26, 1
      %p44 = por %p42, %p43
      %p45 = scmp.ne.s32.totalorder %s34, %s35
      %p46 = scmp.eq.s32.totalorder %s26, 0
      %p47 = por %p45, %p46
      %p48 = scmp.ne.s32.totalorder %s34, %s35
      %p49 = scmp.eq.s32.totalorder %s27, 1
      %p50 = por %p48, %p49
      %p52 = scmp.ne.s32.totalorder %s35, %s51
      %p53 = scmp.eq.s32.totalorder %s27, 0
      %p54 = por %p52, %p53
      %s56 = sadd.s32 %s55, 1
      %p59 = scmp.eq.s32.totalorder %s21, 1
      %p60 = scmp.ne.s32.totalorder %s55, %s57
      %p61 = scmp.eq.s32.totalorder %s21, 0
      %p62 = por %p60, %p61
      %p63 = scmp.ne.s32.totalorder %s55, %s57
      %p64 = scmp.eq.s32.totalorder %s26, 1
      %p65 = por %p63, %p64
      %p66 = scmp.ne.s32.totalorder %s57, %s58
      %p67 = scmp.eq.s32.totalorder %s26, 0
      %p68 = por %p66, %p67
      %p69 = scmp.ne.s32.totalorder %s57, %s58
      %p70 = scmp.eq.s32.totalorder %s27, 1
      %p71 = por %p69, %p70
      %p73 = scmp.ne.s32.totalorder %s58, %s72
      %p74 = scmp.eq.s32.totalorder %s27, 0
      %p75 = por %p73, %p74
      %s77 = sadd.s32 %s76, 1
      %p80 = scmp.eq.s32.totalorder %s21, 1
      %p81 = scmp.ne.s32.totalorder %s76, %s78
      %p82 = scmp.eq.s32.totalorder %s21, 0
      %p83 = por %p81, %p82
      %p84 = scmp.ne.s32.totalorder %s76, %s78
      %p85 = scmp.eq.s32.totalorder %s26, 1
      %p86 = por %p84, %p85
      %p87 = scmp.ne.s32.totalorder %s78, %s79
      %p88 = scmp.eq.s32.totalorder %s26, 0
      %p89 = por %p87, %p88
      %p90 = scmp.ne.s32.totalorder %s78, %s79
      %p91 = scmp.eq.s32.totalorder %s27, 1
      %p92 = por %p90, %p91
      %p94 = scmp.ne.s32.totalorder %s79, %s93
      %p95 = scmp.eq.s32.totalorder %s27, 0
      %p96 = por %p94, %p95
      %s98 = sadd.s32 %s97, 1
      %p101 = scmp.eq.s32.totalorder %s21, 1
      %p102 = scmp.ne.s32.totalorder %s97, %s99
      %p103 = scmp.eq.s32.totalorder %s21, 0
      %p104 = por %p102, %p103
      %p105 = scmp.ne.s32.totalorder %s97, %s99
      %p106 = scmp.eq.s32.totalorder %s26, 1
      %p107 = por %p105, %p106
      %p108 = scmp.ne.s32.totalorder %s99, %s100
      %p109 = scmp.eq.s32.totalorder %s26, 0
      %p110 = por %p108, %p109
      %p111 = scmp.ne.s32.totalorder %s99, %s100
      %p112 = scmp.eq.s32.totalorder %s27, 1
      %p113 = por %p111, %p112
      %p115 = scmp.ne.s32.totalorder %s100, %s114
      %p116 = scmp.eq.s32.totalorder %s27, 0
      %p117 = por %p115, %p116
      %s119 = sadd.s32 %s118, 1
      %p122 = scmp.eq.s32.totalorder %s21, 1
      %p123 = scmp.ne.s32.totalorder %s118, %s120
      %p124 = scmp.eq.s32.totalorder %s21, 0
      %p125 = por %p123, %p124
      %p126 = scmp.ne.s32.totalorder %s118, %s120
      %p127 = scmp.eq.s32.totalorder %s26, 1
      %p128 = por %p126, %p127
      %p129 = scmp.ne.s32.totalorder %s120, %s121
      %p130 = scmp.eq.s32.totalorder %s26, 0
      %p131 = por %p129, %p130
      %p132 = scmp.ne.s32.totalorder %s120, %s121
      %p133 = scmp.eq.s32.totalorder %s27, 1
      %p134 = por %p132, %p133
      %p136 = scmp.ne.s32.totalorder %s121, %s135
      %p137 = scmp.eq.s32.totalorder %s27, 0
      %p138 = por %p136, %p137
      %s140 = sadd.s32 %s139, 1
      %p143 = scmp.eq.s32.totalorder %s21, 1
      %p144 = scmp.ne.s32.totalorder %s139, %s141
      %p145 = scmp.eq.s32.totalorder %s21, 0
      %p146 = por %p144, %p145
      %p147 = scmp.ne.s32.totalorder %s139, %s141
      %p148 = scmp.eq.s32.totalorder %s26, 1
      %p149 = por %p147, %p148
      %p150 = scmp.ne.s32.totalorder %s141, %s142
      %p151 = scmp.eq.s32.totalorder %s26, 0
      %p152 = por %p150, %p151
      %p153 = scmp.ne.s32.totalorder %s141, %s142
      %p154 = scmp.eq.s32.totalorder %s27, 1
      %p155 = por %p153, %p154
      %p157 = scmp.ne.s32.totalorder %s142, %s156
      %p158 = scmp.eq.s32.totalorder %s27, 0
      %p159 = por %p157, %p158
      %s161 = sadd.s32 %s160, 1
      %p164 = scmp.eq.s32.totalorder %s21, 1
      %p165 = scmp.ne.s32.totalorder %s160, %s162
      %p166 = scmp.eq.s32.totalorder %s21, 0
      %p167 = por %p165, %p166
      %p168 = scmp.ne.s32.totalorder %s160, %s162
      %p169 = scmp.eq.s32.totalorder %s26, 1
      %p170 = por %p168, %p169
      %p171 = scmp.ne.s32.totalorder %s162, %s163
      %p172 = scmp.eq.s32.totalorder %s26, 0
      %p173 = por %p171, %p172
      %p174 = scmp.ne.s32.totalorder %s162, %s163
      %p175 = scmp.eq.s32.totalorder %s27, 1
      %p176 = por %p174, %p175
      %p178 = scmp.ne.s32.totalorder %s163, %s177
      %p179 = scmp.eq.s32.totalorder %s27, 0
      %p180 = por %p178, %p179
      %s181 = ssub.s32 %s21, %s28
      %p182 = scmp.eq.s32.totalorder %s181, 0
      %s184 = sadd.s32 %s183, 1
      %s185 = scalar_select %p182, %s183, %s184
      %p188 = pneg %p182
      %p189 = scmp.eq.s32.totalorder %s21, 1
      %p190 = por %p188, %p189
      %p191 = scmp.ne.s32.totalorder %s183, %s186
      %p192 = scmp.eq.s32.totalorder %s21, 0
      %p193 = por %p191, %p192
      %p194 = scmp.ne.s32.totalorder %s183, %s186
      %p195 = scmp.eq.s32.totalorder %s26, 1
      %p196 = por %p194, %p195
      %p197 = scmp.ne.s32.totalorder %s186, %s187
      %p198 = scmp.eq.s32.totalorder %s26, 0
      %p199 = por %p197, %p198
      %p200 = scmp.ne.s32.totalorder %s186, %s187
      %p201 = scmp.eq.s32.totalorder %s27, 1
      %p202 = por %p200, %p201
      %p204 = scmp.ne.s32.totalorder %s187, %s203
      %p205 = scmp.eq.s32.totalorder %s27, 0
      %p206 = por %p204, %p205
      %p207 = scmp.le.s32.totalorder 1, %s21
      %p208 = scmp.lt.s32.totalorder %s21, 3
      %p209 = pnand %p207, %p208
      %p210 = pneg %p209
      // Predicated region
      $region9: #{tpu_custom_call.1} parent=5 // pred_check
        _
      $region10: #{tpu_custom_call.1} parent=5 // pred_check_branch
        %212 = sbr.rel (%p209) target = $region12
      $region11: #{tpu_custom_call.1} parent=5 // pred_region
        %s213 = ssub.s32 %s21, 1
        // Predicated region
        $region13: #{tpu_custom_call.1} parent=11 // pred_check
          %p214 = pneg %p68
        $region14: #{tpu_custom_call.1} parent=11 // pred_check_branch
          %216 = sbr.rel (%p214) target = $region16
        $region15: #{tpu_custom_call.1} parent=11 // pred_region
          %s218 = ssub.s32 1024, 1024
          %219 = vsyncadd [#allocation6], %s218
          %s220 = sshll.u32 [#allocation5], 4
          %s221 = int_to_ptr.vmem [resolvable:$true] %s220
          %226 = dma.hbm_to_vmem [thread:$0]  %s1, 1024, %s221, [#allocation6], 64, 64, 4
        $region16: #{tpu_custom_call.1} parent=11 // pred_fallthru
          _
        // Predicated region
        $region17: #{tpu_custom_call.1} parent=11 // pred_check
          %p227 = pneg %p89
        $region18: #{tpu_custom_call.1} parent=11 // pred_check_branch
          %229 = sbr.rel (%p227) target = $region20
        $region19: #{tpu_custom_call.1} parent=11 // pred_region
          _
        $region20: #{tpu_custom_call.1} parent=11 // pred_fallthru
          _
        // Predicated region
        $region21: #{tpu_custom_call.1} parent=11 // pred_check
          %p230 = pneg %p110
        $region22: #{tpu_custom_call.1} parent=11 // pred_check_branch
          %232 = sbr.rel (%p230) target = $region24
        $region23: #{tpu_custom_call.1} parent=11 // pred_region
          %s234 = ssub.s32 1024, 1024
          %235 = vsyncadd [#allocation6], %s234
          %s236 = sshll.u32 [#allocation7], 4
          %s237 = int_to_ptr.vmem [resolvable:$true] %s236
          %242 = dma.hbm_to_vmem [thread:$0]  %s3, 1024, %s237, [#allocation6], 64, 64, 4
        $region24: #{tpu_custom_call.1} parent=11 // pred_fallthru
          _
        // Predicated region
        $region25: #{tpu_custom_call.1} parent=11 // pred_check
          %p243 = pneg %p131
        $region26: #{tpu_custom_call.1} parent=11 // pred_check_branch
          %245 = sbr.rel (%p243) target = $region28
        $region27: #{tpu_custom_call.1} parent=11 // pred_region
          _
        $region28: #{tpu_custom_call.1} parent=11 // pred_fallthru
          _
        // Predicated region
        $region29: #{tpu_custom_call.1} parent=11 // pred_check
          %p246 = pneg %p152
        $region30: #{tpu_custom_call.1} parent=11 // pred_check_branch
          %248 = sbr.rel (%p246) target = $region32
        $region31: #{tpu_custom_call.1} parent=11 // pred_region
          %s250 = ssub.s32 1024, 1024
          %251 = vsyncadd [#allocation9], %s250
          %s252 = sshll.u32 [#allocation8], 4
          %s253 = int_to_ptr.vmem [resolvable:$true] %s252
          %258 = dma.hbm_to_vmem [thread:$0]  %s5, 1024, %s253, [#allocation9], 64, 64, 4
        $region32: #{tpu_custom_call.1} parent=11 // pred_fallthru
          _
        // Predicated region
        $region33: #{tpu_custom_call.1} parent=11 // pred_check
          %p259 = pneg %p173
        $region34: #{tpu_custom_call.1} parent=11 // pred_check_branch
          %261 = sbr.rel (%p259) target = $region36
        $region35: #{tpu_custom_call.1} parent=11 // pred_region
          _
        $region36: #{tpu_custom_call.1} parent=11 // pred_fallthru
          _
      $region12: #{tpu_custom_call.1} parent=5 // pred_fallthru
        _
      %p262 = scmp.lt.s32.totalorder %s21, 2
      // Predicated region
      $region37: #{tpu_custom_call.1} parent=5 // pred_check
        %p263 = pneg %p262
      $region38: #{tpu_custom_call.1} parent=5 // pred_check_branch
        %265 = sbr.rel (%p263) target = $region40
      $region39: #{tpu_custom_call.1} parent=5 // pred_region
        // Predicated region
        $region41: #{tpu_custom_call.1} parent=39 // pred_check
          %p266 = pneg %p41
        $region42: #{tpu_custom_call.1} parent=39 // pred_check_branch
          %268 = sbr.rel (%p266) target = $region44
        $region43: #{tpu_custom_call.1} parent=39 // pred_region
          %s269 = sand.u32 %s31, 1
          %s270 = scalar_lea.sflag [#allocation3], %s269
          %s271 = sand.u32 %s31, 1
          %s272 = smul.addr %s271, 4
          %s273 = scalar_lea.vmem [#allocation2], %s272
          %s275 = ssub.s32 64, 64
          %276 = vsyncadd %s270, %s275
          %s277 = smul.addr %s21, 64
          %s278 = scalar_lea.hbm %s0, %s277
          %s280 = sshll.u32 %s273, 4
          %s281 = int_to_ptr.vmem [resolvable:$true] %s280
          %283 = dma.hbm_to_vmem [thread:$0]  %s278, 64, %s281, %s270
        $region44: #{tpu_custom_call.1} parent=39 // pred_fallthru
          _
      $region40: #{tpu_custom_call.1} parent=5 // pred_fallthru
        _
      %p284 = scmp.le.s32.totalorder 1, %s21
      %p285 = scmp.lt.s32.totalorder %s21, 3
      %p286 = pnand %p284, %p285
      %p287 = pneg %p286
      // Predicated region
      $region45: #{tpu_custom_call.1} parent=5 // pred_check
        _
      $region46: #{tpu_custom_call.1} parent=5 // pred_check_branch
        %289 = sbr.rel (%p286) target = $region48
      $region47: #{tpu_custom_call.1} parent=5 // pred_region
        %s290 = ssub.s32 %s21, 1
        %s291 = sand.u32 %s34, 1
        %s292 = scalar_lea.sflag [#allocation3], %s291
        %s293 = sand.u32 %s34, 1
        %s294 = smul.addr %s293, 4
        %s295 = scalar_lea.vmem [#allocation2], %s294
        // Predicated region
        $region49: #{tpu_custom_call.1} parent=47 // pred_check
          %p296 = pneg %p47
        $region50: #{tpu_custom_call.1} parent=47 // pred_check_branch
          %298 = sbr.rel (%p296) target = $region52
        $region51: #{tpu_custom_call.1} parent=47 // pred_region
          %299 = dma.done %s292, 64
        $region52: #{tpu_custom_call.1} parent=47 // pred_fallthru
          _
        // Predicated region
        $region53: #{tpu_custom_call.1} parent=47 // pred_check
          %p300 = pneg %p68
        $region54: #{tpu_custom_call.1} parent=47 // pred_check_branch
          %302 = sbr.rel (%p300) target = $region56
        $region55: #{tpu_custom_call.1} parent=47 // pred_region
          %303 = dma.done [#allocation6], 1024
        $region56: #{tpu_custom_call.1} parent=47 // pred_fallthru
          _
        // Predicated region
        $region57: #{tpu_custom_call.1} parent=47 // pred_check
          %p304 = pneg %p110
        $region58: #{tpu_custom_call.1} parent=47 // pred_check_branch
          %306 = sbr.rel (%p304) target = $region60
        $region59: #{tpu_custom_call.1} parent=47 // pred_region
          %307 = dma.done [#allocation6], 1024
        $region60: #{tpu_custom_call.1} parent=47 // pred_fallthru
          _
        // Predicated region
        $region61: #{tpu_custom_call.1} parent=47 // pred_check
          %p308 = pneg %p152
        $region62: #{tpu_custom_call.1} parent=47 // pred_check_branch
          %310 = sbr.rel (%p308) target = $region64
        $region63: #{tpu_custom_call.1} parent=47 // pred_region
          %311 = dma.done [#allocation9], 1024
        $region64: #{tpu_custom_call.1} parent=47 // pred_fallthru
          _
        %s312 = sand.u32 %s34, 1
        %s313 = scalar_lea.sflag [#allocation3], %s312
        %s314 = sand.u32 %s34, 1
        %s315 = smul.addr %s314, 4
        %s316 = scalar_lea.vmem [#allocation2], %s315
        %p317 = pneg %p47
        %p318 = pneg %p44
        %p319 = pneg %p68
        %p320 = pneg %p65
        %p321 = pneg %p89
        %p322 = pneg %p86
        %p323 = pneg %p110
        %p324 = pneg %p107
        %p325 = pneg %p131
        %p326 = pneg %p128
        %p327 = pneg %p152
        %p328 = pneg %p149
        %p329 = pneg %p173
        %p330 = pneg %p170
        %p331 = pneg %p199
        %p332 = pneg %p196
        %s333 = sand.u32 %s186, 1
        %s334 = scalar_lea.sflag [#allocation4], %s333
        %s335 = sand.u32 %s186, 1
        %s336 = smul.addr %s335, 8
        %s337 = scalar_lea.vmem [#allocation10], %s336
        %v339 = vld [vmem:[%s295] sm:$0xf]
        %v340 = vld [vmem:[#allocation5] sm:$0xf]
        %v341 = vld [vmem:[#allocation5 + $0x4] sm:$0xf]
        %v342 = vld [vmem:[#allocation5 + $0x8] sm:$0xf]
        %v343 = vld [vmem:[#allocation5 + $0xc] sm:$0xf]
        %v344 = vld [vmem:[#allocation5 + $0x10] sm:$0xf]
        %v345 = vld [vmem:[#allocation5 + $0x14] sm:$0xf]
        %v346 = vld [vmem:[#allocation5 + $0x18] sm:$0xf]
        %v347 = vld [vmem:[#allocation5 + $0x1c] sm:$0xf]
        %v348 = vld [vmem:[#allocation5 + $0x20] sm:$0xf]
        %v349 = vld [vmem:[#allocation5 + $0x24] sm:$0xf]
        %v350 = vld [vmem:[#allocation5 + $0x28] sm:$0xf]
        %v351 = vld [vmem:[#allocation5 + $0x2c] sm:$0xf]
        %v352 = vld [vmem:[#allocation5 + $0x30] sm:$0xf]
        %v353 = vld [vmem:[#allocation5 + $0x34] sm:$0xf]
        %v354 = vld [vmem:[#allocation5 + $0x38] sm:$0xf]
        %v355 = vld [vmem:[#allocation5 + $0x3c] sm:$0xf]
        %v356 = vld [vmem:[%s2] sm:$0x1]
        %v357 = vunpack.c.l.bf16 %v356
        %v358 = vlaneseq
        %v359 = vshrl.u32 %v358, 7
        %v360 = vsub.s32 0, %v359
        %v361 = vrot.slane %v357, %v360
        %v378 = vunpack.c.l.b16 %v340
        %v379 = vunpack.c.l.b16 %v341
        %v380 = vunpack.c.l.b16 %v342
        %v381 = vunpack.c.l.b16 %v343
        %v382 = vunpack.c.l.b16 %v344
        %v383 = vunpack.c.l.b16 %v345
        %v384 = vunpack.c.l.b16 %v346
        %v385 = vunpack.c.l.b16 %v347
        %v386 = vunpack.c.l.b16 %v348
        %v387 = vunpack.c.l.b16 %v349
        %v388 = vunpack.c.l.b16 %v350
        %v389 = vunpack.c.l.b16 %v351
        %v390 = vunpack.c.l.b16 %v352
        %v391 = vunpack.c.l.b16 %v353
        %v392 = vunpack.c.l.b16 %v354
        %v393 = vunpack.c.l.b16 %v355
        %v394 = vpack.c.b16 %v379, %v378
        %v395 = vpack.c.b16 %v381, %v380
        %v396 = vpack.c.b16 %v383, %v382
        %v397 = vpack.c.b16 %v385, %v384
        %v398 = vpack.c.b16 %v387, %v386
        %v399 = vpack.c.b16 %v389, %v388
        %v400 = vpack.c.b16 %v391, %v390
        %v401 = vpack.c.b16 %v393, %v392
        %410 = vmatprep.subr.bf16.mxu0 0
        %411 = vmatpush1.bf16.msra.mxu0 %v401
        %412 = vmatprep.subr.bf16.mxu0 0
        %413 = vmatpush1.bf16.msra.mxu0 %v400
        %414 = vmatprep.subr.bf16.mxu0 0
        %415 = vmatpush1.bf16.msra.mxu0 %v399
        %416 = vmatprep.subr.bf16.mxu0 0
        %417 = vmatpush1.bf16.msra.mxu0 %v398
        %418 = vmatprep.subr.bf16.mxu0 0
        %419 = vmatpush1.bf16.msra.mxu0 %v397
        %420 = vmatprep.subr.bf16.mxu0 0
        %421 = vmatpush1.bf16.msra.mxu0 %v396
        %422 = vmatprep.subr.bf16.mxu0 0
        %423 = vmatpush1.bf16.msra.mxu0 %v395
        %424 = vmatprep.subr.bf16.mxu0 0
        %425 = vmatpush1.bf16.msra.mxu0 %v394
        %426 = vmatprep.subr.bf16.mxu0 0
        %427 = vmatpush2.bf16.msra.mxu0 0
        %428 = vmatprep.subr.bf16.mxu0 0
        %429 = vmatpush2.bf16.msra.mxu0 0
        %430 = vmatprep.subr.bf16.mxu0 0
        %431 = vmatpush2.bf16.msra.mxu0 0
        %432 = vmatprep.subr.bf16.mxu0 0
        %433 = vmatpush2.bf16.msra.mxu0 0
        %434 = vmatprep.subr.bf16.mxu0 0
        %435 = vmatpush2.bf16.msra.mxu0 0
        %436 = vmatprep.subr.bf16.mxu0 0
        %437 = vmatpush2.bf16.msra.mxu0 0
        %438 = vmatprep.subr.bf16.mxu0 0
        %439 = vmatpush2.bf16.msra.mxu0 0
        %440 = vmatprep.subr.bf16.mxu0 0
        %441 = vmatpush2.bf16.msra.mxu0 0
        %442 = vmatprep.mubr.bf16.mxu0 0
        %443 = vmatmul.mubr.bf16.gmra.mxu0 %v339
        %v444 = vpop.f32.mrf.mxu0
        %v445 = vadd.f32 %v361, %v444
        %v446 = vpop.f32.mrf.mxu0
        %v447 = vpop.f32.mrf.mxu0
        %v448 = vpop.f32.mrf.mxu0
        %449 = vdwg.mxu0
        %v450 = vmax.f32 %v445, 0.0
        %v451 = vpack.c.bf16 %v450, %v450
        %v452 = vld [vmem:[#allocation7] sm:$0xf]
        %v453 = vld [vmem:[#allocation7 + $0x4] sm:$0xf]
        %v454 = vld [vmem:[#allocation7 + $0x8] sm:$0xf]
        %v455 = vld [vmem:[#allocation7 + $0xc] sm:$0xf]
        %v456 = vld [vmem:[#allocation7 + $0x10] sm:$0xf]
        %v457 = vld [vmem:[#allocation7 + $0x14] sm:$0xf]
        %v458 = vld [vmem:[#allocation7 + $0x18] sm:$0xf]
        %v459 = vld [vmem:[#allocation7 + $0x1c] sm:$0xf]
        %v460 = vld [vmem:[#allocation7 + $0x20] sm:$0xf]
        %v461 = vld [vmem:[#allocation7 + $0x24] sm:$0xf]
        %v462 = vld [vmem:[#allocation7 + $0x28] sm:$0xf]
        %v463 = vld [vmem:[#allocation7 + $0x2c] sm:$0xf]
        %v464 = vld [vmem:[#allocation7 + $0x30] sm:$0xf]
        %v465 = vld [vmem:[#allocation7 + $0x34] sm:$0xf]
        %v466 = vld [vmem:[#allocation7 + $0x38] sm:$0xf]
        %v467 = vld [vmem:[#allocation7 + $0x3c] sm:$0xf]
        %v468 = vld [vmem:[%s4] sm:$0x1]
        %v469 = vunpack.c.l.bf16 %v468
        %v470 = vlaneseq
        %v471 = vshrl.u32 %v470, 7
        %v472 = vsub.s32 0, %v471
        %v473 = vrot.slane %v469, %v472
        %v490 = vunpack.c.l.b16 %v452
        %v491 = vunpack.c.l.b16 %v453
        %v492 = vunpack.c.l.b16 %v454
        %v493 = vunpack.c.l.b16 %v455
        %v494 = vunpack.c.l.b16 %v456
        %v495 = vunpack.c.l.b16 %v457
        %v496 = vunpack.c.l.b16 %v458
        %v497 = vunpack.c.l.b16 %v459
        %v498 = vunpack.c.l.b16 %v460
        %v499 = vunpack.c.l.b16 %v461
        %v500 = vunpack.c.l.b16 %v462
        %v501 = vunpack.c.l.b16 %v463
        %v502 = vunpack.c.l.b16 %v464
        %v503 = vunpack.c.l.b16 %v465
        %v504 = vunpack.c.l.b16 %v466
        %v505 = vunpack.c.l.b16 %v467
        %v506 = vpack.c.b16 %v491, %v490
        %v507 = vpack.c.b16 %v493, %v492
        %v508 = vpack.c.b16 %v495, %v494
        %v509 = vpack.c.b16 %v497, %v496
        %v510 = vpack.c.b16 %v499, %v498
        %v511 = vpack.c.b16 %v501, %v500
        %v512 = vpack.c.b16 %v503, %v502
        %v513 = vpack.c.b16 %v505, %v504
        %522 = vmatprep.subr.bf16.mxu0 0
        %523 = vmatpush1.bf16.msra.mxu0 %v513
        %524 = vmatprep.subr.bf16.mxu0 0
        %525 = vmatpush1.bf16.msra.mxu0 %v512
        %526 = vmatprep.subr.bf16.mxu0 0
        %527 = vmatpush1.bf16.msra.mxu0 %v511
        %528 = vmatprep.subr.bf16.mxu0 0
        %529 = vmatpush1.bf16.msra.mxu0 %v510
        %530 = vmatprep.subr.bf16.mxu0 0
        %531 = vmatpush1.bf16.msra.mxu0 %v509
        %532 = vmatprep.subr.bf16.mxu0 0
        %533 = vmatpush1.bf16.msra.mxu0 %v508
        %534 = vmatprep.subr.bf16.mxu0 0
        %535 = vmatpush1.bf16.msra.mxu0 %v507
        %536 = vmatprep.subr.bf16.mxu0 0
        %537 = vmatpush1.bf16.msra.mxu0 %v506
        %538 = vmatprep.subr.bf16.mxu0 0
        %539 = vmatpush2.bf16.msra.mxu0 0
        %540 = vmatprep.subr.bf16.mxu0 0
        %541 = vmatpush2.bf16.msra.mxu0 0
        %542 = vmatprep.subr.bf16.mxu0 0
        %543 = vmatpush2.bf16.msra.mxu0 0
        %544 = vmatprep.subr.bf16.mxu0 0
        %545 = vmatpush2.bf16.msra.mxu0 0
        %546 = vmatprep.subr.bf16.mxu0 0
        %547 = vmatpush2.bf16.msra.mxu0 0
        %548 = vmatprep.subr.bf16.mxu0 0
        %549 = vmatpush2.bf16.msra.mxu0 0
        %550 = vmatprep.subr.bf16.mxu0 0
        %551 = vmatpush2.bf16.msra.mxu0 0
        %552 = vmatprep.subr.bf16.mxu0 0
        %553 = vmatpush2.bf16.msra.mxu0 0
        %554 = vmatprep.mubr.bf16.mxu0 0
        %555 = vmatmul.mubr.bf16.gmra.mxu0 %v451
        %v556 = vpop.f32.mrf.mxu0
        %v557 = vadd.f32 %v473, %v556
        %v558 = vpop.f32.mrf.mxu0
        %v559 = vpop.f32.mrf.mxu0
        %v560 = vpop.f32.mrf.mxu0
        %561 = vdwg.mxu0
        %v562 = vmax.f32 %v557, 0.0
        %v563 = vpack.c.bf16 %v562, %v562
        %v564 = vld [vmem:[#allocation8] sm:$0xf]
        %v565 = vld [vmem:[#allocation8 + $0x4] sm:$0xf]
        %v566 = vld [vmem:[#allocation8 + $0x8] sm:$0xf]
        %v567 = vld [vmem:[#allocation8 + $0xc] sm:$0xf]
        %v568 = vld [vmem:[#allocation8 + $0x10] sm:$0xf]
        %v569 = vld [vmem:[#allocation8 + $0x14] sm:$0xf]
        %v570 = vld [vmem:[#allocation8 + $0x18] sm:$0xf]
        %v571 = vld [vmem:[#allocation8 + $0x1c] sm:$0xf]
        %v572 = vld [vmem:[#allocation8 + $0x20] sm:$0xf]
        %v573 = vld [vmem:[#allocation8 + $0x24] sm:$0xf]
        %v574 = vld [vmem:[#allocation8 + $0x28] sm:$0xf]
        %v575 = vld [vmem:[#allocation8 + $0x2c] sm:$0xf]
        %v576 = vld [vmem:[#allocation8 + $0x30] sm:$0xf]
        %v577 = vld [vmem:[#allocation8 + $0x34] sm:$0xf]
        %v578 = vld [vmem:[#allocation8 + $0x38] sm:$0xf]
        %v579 = vld [vmem:[#allocation8 + $0x3c] sm:$0xf]
        %v580 = vld [vmem:[%s6] sm:$0x1]
        %v581 = vunpack.c.l.bf16 %v580
        %v582 = vlaneseq
        %v583 = vshrl.u32 %v582, 7
        %v584 = vsub.s32 0, %v583
        %v585 = vrot.slane %v581, %v584
        %v602 = vunpack.c.l.b16 %v564
        %v603 = vunpack.c.l.b16 %v565
        %v604 = vunpack.c.l.b16 %v566
        %v605 = vunpack.c.l.b16 %v567
        %v606 = vunpack.c.l.b16 %v568
        %v607 = vunpack.c.l.b16 %v569
        %v608 = vunpack.c.l.b16 %v570
        %v609 = vunpack.c.l.b16 %v571
        %v610 = vunpack.c.l.b16 %v572
        %v611 = vunpack.c.l.b16 %v573
        %v612 = vunpack.c.l.b16 %v574
        %v613 = vunpack.c.l.b16 %v575
        %v614 = vunpack.c.l.b16 %v576
        %v615 = vunpack.c.l.b16 %v577
        %v616 = vunpack.c.l.b16 %v578
        %v617 = vunpack.c.l.b16 %v579
        %v618 = vpack.c.b16 %v603, %v602
        %v619 = vpack.c.b16 %v605, %v604
        %v620 = vpack.c.b16 %v607, %v606
        %v621 = vpack.c.b16 %v609, %v608
        %v622 = vpack.c.b16 %v611, %v610
        %v623 = vpack.c.b16 %v613, %v612
        %v624 = vpack.c.b16 %v615, %v614
        %v625 = vpack.c.b16 %v617, %v616
        %634 = vmatprep.subr.bf16.mxu0 0
        %635 = vmatpush1.bf16.msra.mxu0 %v625
        %636 = vmatprep.subr.bf16.mxu0 0
        %637 = vmatpush1.bf16.msra.mxu0 %v624
        %638 = vmatprep.subr.bf16.mxu0 0
        %639 = vmatpush1.bf16.msra.mxu0 %v623
        %640 = vmatprep.subr.bf16.mxu0 0
        %641 = vmatpush1.bf16.msra.mxu0 %v622
        %642 = vmatprep.subr.bf16.mxu0 0
        %643 = vmatpush1.bf16.msra.mxu0 %v621
        %644 = vmatprep.subr.bf16.mxu0 0
        %645 = vmatpush1.bf16.msra.mxu0 %v620
        %646 = vmatprep.subr.bf16.mxu0 0
        %647 = vmatpush1.bf16.msra.mxu0 %v619
        %648 = vmatprep.subr.bf16.mxu0 0
        %649 = vmatpush1.bf16.msra.mxu0 %v618
        %650 = vmatprep.subr.bf16.mxu0 0
        %651 = vmatpush2.bf16.msra.mxu0 0
        %652 = vmatprep.subr.bf16.mxu0 0
        %653 = vmatpush2.bf16.msra.mxu0 0
        %654 = vmatprep.subr.bf16.mxu0 0
        %655 = vmatpush2.bf16.msra.mxu0 0
        %656 = vmatprep.subr.bf16.mxu0 0
        %657 = vmatpush2.bf16.msra.mxu0 0
        %658 = vmatprep.subr.bf16.mxu0 0
        %659 = vmatpush2.bf16.msra.mxu0 0
        %660 = vmatprep.subr.bf16.mxu0 0
        %661 = vmatpush2.bf16.msra.mxu0 0
        %662 = vmatprep.subr.bf16.mxu0 0
        %663 = vmatpush2.bf16.msra.mxu0 0
        %664 = vmatprep.subr.bf16.mxu0 0
        %665 = vmatpush2.bf16.msra.mxu0 0
        %666 = vmatprep.mubr.bf16.mxu0 0
        %667 = vmatmul.mubr.bf16.gmra.mxu0 %v563
        %v668 = vpop.f32.mrf.mxu0
        %v669 = vadd.f32 %v585, %v668
        %v670 = vpop.f32.mrf.mxu0
        %v671 = vpop.f32.mrf.mxu0
        %v672 = vpop.f32.mrf.mxu0
        %673 = vdwg.mxu0
        %674 = vst [vmem:[%s337] sm:$0xff] %v669
        %s675 = sand.u32 %s186, 1
        %s676 = scalar_lea.sflag [#allocation4], %s675
        %s677 = sand.u32 %s186, 1
        %s678 = smul.addr %s677, 8
        %s679 = scalar_lea.vmem [#allocation10], %s678
        // Predicated region
        $region65: #{tpu_custom_call.1} parent=47 // pred_check
          %p680 = pneg %p196
        $region66: #{tpu_custom_call.1} parent=47 // pred_check_branch
          %682 = sbr.rel (%p680) target = $region68
        $region67: #{tpu_custom_call.1} parent=47 // pred_region
          %s684 = ssub.s32 128, 128
          %685 = vsyncadd %s676, %s684
          %s686 = smul.addr %s26, 128
          %s687 = scalar_lea.hbm %s7, %s686
          %s689 = sshll.u32 %s679, 4
          %s690 = int_to_ptr.vmem [resolvable:$true] %s689
          %692 = dma.vmem_to_hbm [thread:$0]  %s690, 128, %s687, %s676
        $region68: #{tpu_custom_call.1} parent=47 // pred_fallthru
          _
      $region48: #{tpu_custom_call.1} parent=5 // pred_fallthru
        _
      %p693 = scmp.le.s32.totalorder 2, %s21
      // Predicated region
      $region69: #{tpu_custom_call.1} parent=5 // pred_check
        %p694 = pneg %p693
      $region70: #{tpu_custom_call.1} parent=5 // pred_check_branch
        %696 = sbr.rel (%p694) target = $region72
      $region71: #{tpu_custom_call.1} parent=5 // pred_region
        %s697 = ssub.s32 %s21, 2
        // Predicated region
        $region73: #{tpu_custom_call.1} parent=71 // pred_check
          %p698 = pneg %p202
        $region74: #{tpu_custom_call.1} parent=71 // pred_check_branch
          %700 = sbr.rel (%p698) target = $region76
        $region75: #{tpu_custom_call.1} parent=71 // pred_region
          %s701 = sand.u32 %s187, 1
          %s702 = scalar_lea.sflag [#allocation4], %s701
          %s703 = sand.u32 %s187, 1
          %s704 = smul.addr %s703, 8
          %s705 = scalar_lea.vmem [#allocation10], %s704
          %706 = dma.done %s702, 128
        $region76: #{tpu_custom_call.1} parent=71 // pred_fallthru
          _
      $region72: #{tpu_custom_call.1} parent=5 // pred_fallthru
        _
    $region6: #{tpu_custom_call.1} parent=1 // loop_footer
      %s25 = sadd.s32 1, %s21
    $region7: #{tpu_custom_call.1} parent=1 // loop_footer_branch
      %20 = sbr.rel target = $region3
    $region8: #{tpu_custom_call.1} parent=1 // loop_exit
      _
    %707 = vsyncpa [#allocation3], 1
    %s708 = scalar_lea.sflag [#allocation3], 1
    %709 = vsyncpa %s708, 1
    %710 = vsyncpa [#allocation6], 1
    %711 = vsyncpa [#allocation9], 1
    %712 = vsyncpa [#allocation4], 1
    %s713 = scalar_lea.sflag [#allocation4], 1
    %714 = vsyncpa %s713, 1

</llo_original>
